<compile_context>
chip_gen: v6e
topology: v6e:2x2x1
jax: 0.10.0
libtpu: 0.0.40
codegen_flags: <defaults>
</compile_context>

<pallas_src>
import functools

import jax
import jax.numpy as jnp
from jax import lax
from jax.experimental import pallas as pl
from jax.experimental.pallas import tpu as pltpu


def _round_up(x, m):
    return (x + m - 1) // m * m


def _dqn_kernel(x_ref,            # (T, Bp, I)  f32, time-major
                w_ih_ref,         # (I, 3*Hp)   fused [r|z|n] input-gate weights
                w_hh_ref,         # (Hp, 3*Hp)  fused [r|z|n] hidden-gate weights
                b_i_ref,          # (1, 3*Hp)   [b_ir+b_hr | b_iz+b_hz | b_in]
                b_hn_ref,         # (1, Hp)     b_hn (kept inside r*(...))
                wq_ref, bq_ref,   # (Hp, Hp), (1, Hp)
                wQ_ref, bQ_ref,   # (Hp, Ap), (1, Ap)
                out_ref,          # (Bp, Ap)
                gx_ref):          # VMEM scratch (T*Bp, 3*Hp) f32
    T, Bp, _ = x_ref.shape
    Hp = w_hh_ref.shape[0]

    # ---- Pre-loop: ALL input projections in one big MXU dot (h-independent,
    # so it is off the serial recurrence path). x is time-major, so collapsing
    # (T, Bp, I) -> (T*Bp, I) is a pure reinterpretation and each time step is
    # a contiguous, sublane-aligned block of Bp rows in the result.
    x_flat = x_ref[...].reshape(T * Bp, x_ref.shape[2])
    gx_ref[...] = (
        jnp.dot(x_flat, w_ih_ref[...], preferred_element_type=jnp.float32)
        + jnp.broadcast_to(b_i_ref[...], (T * Bp, 3 * Hp)))

    # Hoist the small bias broadcast out of the unrolled loop (1 vreg).
    b_hn_b = jnp.broadcast_to(b_hn_ref[...], (Bp, Hp))

    h = jnp.zeros((Bp, Hp), jnp.float32)     # PyTorch GRU default h0 = 0

    # T is small & static -> fully unrolled. For larger T switch to
    # lax.fori_loop(0, T, body, h, unroll=k) with pl.ds time indexing.
    for t in range(T):
        # Static, sublane-aligned slice of the precomputed input projections.
        gx = gx_ref[t * Bp:(t + 1) * Bp, :]
        # Read W_hh from VMEM just-in-time each step (do not pin ~48 vregs of
        # weights across the whole recurrence -> no spills of h/r/z/n).
        gh = jnp.dot(h, w_hh_ref[...], preferred_element_type=jnp.float32)
        r = jax.nn.sigmoid(gx[:, 0:Hp] + gh[:, 0:Hp])
        z = jax.nn.sigmoid(gx[:, Hp:2 * Hp] + gh[:, Hp:2 * Hp])
        n = jnp.tanh(gx[:, 2 * Hp:3 * Hp] + r * (gh[:, 2 * Hp:3 * Hp] + b_hn_b))
        h = (1.0 - z) * n + z * h

    # x_q = relu(fc_q(h));  Q = Q(x_q)  -- Ap multiple of 128 -> lane-dense store.
    x_q = jnp.maximum(
        jnp.dot(h, wq_ref[...], preferred_element_type=jnp.float32) + bq_ref[...], 0.0)
    out_ref[...] = (
        jnp.dot(x_q, wQ_ref[...], preferred_element_type=jnp.float32) + bQ_ref[...]
    ).astype(out_ref.dtype)


def pack_params(params):
    """One-time setup: fuse per-gate GRU weights and zero-pad to lane/sublane
    friendly shapes. Call this OUTSIDE the per-step/act() hot path and reuse
    the packed dict for every forward call.

    Zero padding is exact: padded h lanes stay 0 through the recurrence and
    padded fc_q / Q rows+cols are zero, so slicing the padded output recovers
    the unpadded result (up to f32 rounding).
    """
    I = params["wir"].shape[0]
    H = params["whr"].shape[0]
    A = params["wQ"].shape[1]
    Hp = _round_up(H, 128)
    Ap = _round_up(A, 128)

    def pad2(w, rows, cols):
        return jnp.pad(w, ((0, rows - w.shape[0]), (0, cols - w.shape[1])))

    w_ih = jnp.concatenate([pad2(params["wir"], I, Hp),
                            pad2(params["wiz"], I, Hp),
                            pad2(params["win"], I, Hp)], axis=1)            # (I, 3Hp)
    w_hh = jnp.concatenate([pad2(params["whr"], Hp, Hp),
                            pad2(params["whz"], Hp, Hp),
                            pad2(params["whn"], Hp, Hp)], axis=1)           # (Hp, 3Hp)
    b_i = jnp.concatenate([pad2(params["bir"] + params["bhr"], 1, Hp),      # fold r bias
                           pad2(params["biz"] + params["bhz"], 1, Hp),      # fold z bias
                           pad2(params["bin"], 1, Hp)], axis=1)             # (1, 3Hp)
    b_hn = pad2(params["bhn"], 1, Hp)                                       # (1, Hp)
    wq = pad2(params["wq"], Hp, Hp)
    bq = pad2(params["bq"], 1, Hp)
    wQ = pad2(params["wQ"], Hp, Ap)
    bQ = pad2(params["bQ"], 1, Ap)
    return dict(w_ih=w_ih, w_hh=w_hh, b_i=b_i, b_hn=b_hn,
                wq=wq, bq=bq, wQ=wQ, bQ=bQ), Hp, Ap


def dqn_forward_pallas(state, packed, *, n_actions):
    """state: (B, T, I) float32 (batch_first, like the PyTorch module).
    `packed` is the already-padded/fused weight dict from pack_params()."""
    B, T, I = state.shape
    Hp = packed["w_hh"].shape[0]
    Ap = packed["wQ"].shape[1]
    Bp = _round_up(B, 8)                                   # sublane-align batch

    # Single wrapper transpose to time-major + batch pad (cheap, outside kernel).
    x_p = jnp.pad(jnp.transpose(state, (1, 0, 2)),
                  ((0, 0), (0, Bp - B), (0, 0)))           # (T, Bp, I)

    args = (x_p, packed["w_ih"], packed["w_hh"], packed["b_i"], packed["b_hn"],
            packed["wq"], packed["bq"], packed["wQ"], packed["bQ"])

    # Whole-array VMEM residency (a few hundred KiB even padded — far under
    # the 64 MiB v7x / 128 MiB v5e-v6e VMEM budgets at these shapes).
    vmem = pl.BlockSpec(memory_space=pltpu.MemorySpace.VMEM)
    out_p = pl.pallas_call(
        _dqn_kernel,
        out_shape=jax.ShapeDtypeStruct((Bp, Ap), jnp.float32),
        in_specs=[vmem] * len(args),
        out_specs=vmem,
        scratch_shapes=[pltpu.VMEM((T * Bp, 3 * Hp), jnp.float32)],
    )(*args)
    # TODO(synk): for large production batches (esp. v7x with 2 TensorCores and
    # its smaller VMEM), add a leading batch-tile grid axis with
    # dimension_semantics=("parallel",) and tile x/out over batch blocks.
    return out_p[:B, :n_actions]


def init_params(key, input_size, hidden, n_actions):
    """Deterministic synthetic weights matching nn.GRU / nn.Linear shapes."""
    ks = jax.random.split(key, 12)
    s_gru = 1.0 / jnp.sqrt(hidden)

    # GRU: weight_ih_l0 (3H, I), weight_hh_l0 (3H, H), biases (3H,)  [r, z, n order]
    w_ih = jax.random.uniform(ks[0], (3 * hidden, input_size), jnp.float32, -s_gru, s_gru)
    w_hh = jax.random.uniform(ks[1], (3 * hidden, hidden), jnp.float32, -s_gru, s_gru)
    b_ih = jax.random.uniform(ks[2], (3 * hidden,), jnp.float32, -s_gru, s_gru)
    b_hh = jax.random.uniform(ks[3], (3 * hidden,), jnp.float32, -s_gru, s_gru)

    # fc_q: (H, H), Q: (A, H)
    s_fc = 1.0 / jnp.sqrt(hidden)
    w_fcq = jax.random.uniform(ks[4], (hidden, hidden), jnp.float32, -s_fc, s_fc)
    b_fcq = jax.random.uniform(ks[5], (hidden,), jnp.float32, -s_fc, s_fc)
    w_Q = jax.random.uniform(ks[6], (n_actions, hidden), jnp.float32, -s_fc, s_fc)
    b_Q = jax.random.uniform(ks[7], (n_actions,), jnp.float32, -s_fc, s_fc)

    H = hidden
    params = {
        # split gate weights, pre-transposed to right-multiply form
        "wir": w_ih[0 * H:1 * H].T, "wiz": w_ih[1 * H:2 * H].T, "win": w_ih[2 * H:3 * H].T,
        "whr": w_hh[0 * H:1 * H].T, "whz": w_hh[1 * H:2 * H].T, "whn": w_hh[2 * H:3 * H].T,
        "bir": b_ih[0 * H:1 * H].reshape(1, H),
        "biz": b_ih[1 * H:2 * H].reshape(1, H),
        "bin": b_ih[2 * H:3 * H].reshape(1, H),
        "bhr": b_hh[0 * H:1 * H].reshape(1, H),
        "bhz": b_hh[1 * H:2 * H].reshape(1, H),
        "bhn": b_hh[2 * H:3 * H].reshape(1, H),
        "wq": w_fcq.T, "bq": b_fcq.reshape(1, H),
        "wQ": w_Q.T, "bQ": b_Q.reshape(1, n_actions),
    }
    return params


def dqn_forward_ref(state, params):
    """Pure-JAX reference (lax.scan GRU) for numerical validation."""
    B = state.shape[0]
    H = params["whr"].shape[0]
    h0 = jnp.zeros((B, H), jnp.float32)

    def step(h, x_t):
        r = jax.nn.sigmoid(x_t @ params["wir"] + params["bir"]
                           + h @ params["whr"] + params["bhr"])
        z = jax.nn.sigmoid(x_t @ params["wiz"] + params["biz"]
                           + h @ params["whz"] + params["bhz"])
        n = jnp.tanh(x_t @ params["win"] + params["bin"]
                     + r * (h @ params["whn"] + params["bhn"]))
        h_new = (1.0 - z) * n + z * h
        return h_new, None

    h_final, _ = lax.scan(step, h0, jnp.transpose(state, (1, 0, 2)))
    x_q = jnp.maximum(h_final @ params["wq"] + params["bq"], 0.0)
    return x_q @ params["wQ"] + params["bQ"]


if __name__ == "__main__":
    # Small shapes consistent with the module's forward:
    #   state: (batch, seq, input_dims[1]); fc_dims -> hidden; n_actions outputs.
    B, T, I = 2, 8, 16
    H, A = 32, 4

    key = jax.random.PRNGKey(0)
    k_x, k_p = jax.random.split(key)
    state = jax.random.normal(k_x, (B, T, I), jnp.float32)
    params = init_params(k_p, I, H, A)

    # One-time weight packing, OUTSIDE the per-call hot path.
    packed, _, _ = pack_params(params)
    packed = jax.tree_util.tree_map(jnp.asarray, packed)

    fwd = jax.jit(functools.partial(dqn_forward_pallas, n_actions=A))
    q_pallas = jax.block_until_ready(fwd(state, packed))
    q_ref = jax.block_until_ready(dqn_forward_ref(state, params))

    assert q_pallas.shape == (B, A)
    assert jnp.allclose(q_pallas, q_ref, atol=1e-4, rtol=1e-4), (
        f"max abs err {jnp.max(jnp.abs(q_pallas - q_ref))}")

    print("KERNEL_OK")
</pallas_src>

<mosaic_0001>
module attributes {stable_mosaic.version = 11 : i64} {
  func.func @_dqn_kernel(%arg0: memref<8x8x16xf32, #tpu.memory_space<vmem>>, %arg1: memref<16x384xf32, #tpu.memory_space<vmem>>, %arg2: memref<128x384xf32, #tpu.memory_space<vmem>>, %arg3: memref<1x384xf32, #tpu.memory_space<vmem>>, %arg4: memref<1x128xf32, #tpu.memory_space<vmem>>, %arg5: memref<128x128xf32, #tpu.memory_space<vmem>>, %arg6: memref<1x128xf32, #tpu.memory_space<vmem>>, %arg7: memref<128x128xf32, #tpu.memory_space<vmem>>, %arg8: memref<1x128xf32, #tpu.memory_space<vmem>>, %arg9: memref<8x128xf32, #tpu.memory_space<vmem>>, %arg10: memref<64x384xf32, #tpu.memory_space<vmem>>) attributes {dimension_semantics = [], scalar_prefetch = 0 : i64, scratch_operands = 1 : i64, tpu.core_type = #tpu.core_type<tc>} {
    %c0 = arith.constant 0 : index
    %c0_0 = arith.constant 0 : index
    %c0_1 = arith.constant 0 : index
    %0 = vector.load %arg0[%c0, %c0_0, %c0_1] : memref<8x8x16xf32, #tpu.memory_space<vmem>>, vector<8x8x16xf32>
    %1 = vector.shape_cast %0 : vector<8x8x16xf32> to vector<64x16xf32>
    %c0_2 = arith.constant 0 : index
    %c0_3 = arith.constant 0 : index
    %2 = vector.load %arg1[%c0_2, %c0_3] : memref<16x384xf32, #tpu.memory_space<vmem>>, vector<16x384xf32>
    %cst = arith.constant dense<0.000000e+00> : vector<64x384xf32>
    %3 = tpu.matmul %1, %2, %cst {dimension_numbers = #tpu.dot_dimension_numbers<[1], [0], [0], [1], [0, 0, 1, 1], [], []>} : vector<64x16xf32>, vector<16x384xf32>, vector<64x384xf32> -> vector<64x384xf32>
    %c0_4 = arith.constant 0 : index
    %c0_5 = arith.constant 0 : index
    %4 = vector.load %arg3[%c0_4, %c0_5] : memref<1x384xf32, #tpu.memory_space<vmem>>, vector<1x384xf32>
    %5 = vector.shape_cast %4 : vector<1x384xf32> to vector<1x384xf32>
    %6 = vector.broadcast %5 : vector<1x384xf32> to vector<64x384xf32>
    %7 = arith.addf %3, %6 : vector<64x384xf32>
    %c0_6 = arith.constant 0 : index
    %c0_7 = arith.constant 0 : index
    %8 = vector.load %arg10[%c0_6, %c0_7] : memref<64x384xf32, #tpu.memory_space<vmem>>, vector<64x384xf32>
    tpu.vector_store %arg10[%c0_6, %c0_7], %7 {strides = array<i32>} : memref<64x384xf32, #tpu.memory_space<vmem>>, vector<64x384xf32>,
    %c0_8 = arith.constant 0 : index
    %c0_9 = arith.constant 0 : index
    %9 = vector.load %arg4[%c0_8, %c0_9] : memref<1x128xf32, #tpu.memory_space<vmem>>, vector<1x128xf32>
    %10 = vector.shape_cast %9 : vector<1x128xf32> to vector<1x128xf32>
    %11 = vector.broadcast %10 : vector<1x128xf32> to vector<8x128xf32>
    %cst_10 = arith.constant 0.000000e+00 : f32
    %12 = vector.broadcast %cst_10 : f32 to vector<8x128xf32>
    %c0_11 = arith.constant 0 : index
    %c0_12 = arith.constant 0 : index
    %13 = vector.load %arg10[%c0_11, %c0_12] : memref<64x384xf32, #tpu.memory_space<vmem>>, vector<8x384xf32>
    %c0_13 = arith.constant 0 : index
    %c0_14 = arith.constant 0 : index
    %14 = vector.load %arg2[%c0_13, %c0_14] : memref<128x384xf32, #tpu.memory_space<vmem>>, vector<128x384xf32>
    %cst_15 = arith.constant dense<0.000000e+00> : vector<8x384xf32>
    %15 = tpu.matmul %12, %14, %cst_15 {dimension_numbers = #tpu.dot_dimension_numbers<[1], [0], [0], [1], [0, 0, 1, 1], [], []>} : vector<8x128xf32>, vector<128x384xf32>, vector<8x384xf32> -> vector<8x384xf32>
    %16 = vector.extract_strided_slice %13 {offsets = [0, 0], sizes = [8, 128], strides = [1, 1]} : vector<8x384xf32> to vector<8x128xf32>
    %17 = vector.extract_strided_slice %15 {offsets = [0, 0], sizes = [8, 128], strides = [1, 1]} : vector<8x384xf32> to vector<8x128xf32>
    %18 = arith.addf %16, %17 : vector<8x128xf32>
    %19 = arith.negf %18 : vector<8x128xf32>
    %20 = math.exp %19 : vector<8x128xf32>
    %cst_16 = arith.constant 1.000000e+00 : f32
    %21 = vector.broadcast %cst_16 : f32 to vector<8x128xf32>
    %22 = arith.addf %21, %20 : vector<8x128xf32>
    %23 = arith.divf %21, %22 : vector<8x128xf32>
    %24 = vector.extract_strided_slice %13 {offsets = [0, 128], sizes = [8, 128], strides = [1, 1]} : vector<8x384xf32> to vector<8x128xf32>
    %25 = vector.extract_strided_slice %15 {offsets = [0, 128], sizes = [8, 128], strides = [1, 1]} : vector<8x384xf32> to vector<8x128xf32>
    %26 = arith.addf %24, %25 : vector<8x128xf32>
    %27 = arith.negf %26 : vector<8x128xf32>
    %28 = math.exp %27 : vector<8x128xf32>
    %cst_17 = arith.constant 1.000000e+00 : f32
    %29 = vector.broadcast %cst_17 : f32 to vector<8x128xf32>
    %30 = arith.addf %29, %28 : vector<8x128xf32>
    %31 = arith.divf %29, %30 : vector<8x128xf32>
    %32 = vector.extract_strided_slice %13 {offsets = [0, 256], sizes = [8, 128], strides = [1, 1]} : vector<8x384xf32> to vector<8x128xf32>
    %33 = vector.extract_strided_slice %15 {offsets = [0, 256], sizes = [8, 128], strides = [1, 1]} : vector<8x384xf32> to vector<8x128xf32>
    %34 = arith.addf %33, %11 : vector<8x128xf32>
    %35 = arith.mulf %23, %34 : vector<8x128xf32>
    %36 = arith.addf %32, %35 : vector<8x128xf32>
    %37 = math.tanh %36 : vector<8x128xf32>
    %cst_18 = arith.constant 1.000000e+00 : f32
    %38 = vector.broadcast %cst_18 : f32 to vector<8x128xf32>
    %39 = arith.subf %38, %31 : vector<8x128xf32>
    %40 = arith.mulf %39, %37 : vector<8x128xf32>
    %41 = arith.mulf %31, %12 : vector<8x128xf32>
    %42 = arith.addf %40, %41 : vector<8x128xf32>
    %c8 = arith.constant 8 : index
    %c0_19 = arith.constant 0 : index
    %43 = vector.load %arg10[%c8, %c0_19] : memref<64x384xf32, #tpu.memory_space<vmem>>, vector<8x384xf32>
    %c0_20 = arith.constant 0 : index
    %c0_21 = arith.constant 0 : index
    %44 = vector.load %arg2[%c0_20, %c0_21] : memref<128x384xf32, #tpu.memory_space<vmem>>, vector<128x384xf32>
    %cst_22 = arith.constant dense<0.000000e+00> : vector<8x384xf32>
    %45 = tpu.matmul %42, %44, %cst_22 {dimension_numbers = #tpu.dot_dimension_numbers<[1], [0], [0], [1], [0, 0, 1, 1], [], []>} : vector<8x128xf32>, vector<128x384xf32>, vector<8x384xf32> -> vector<8x384xf32>
    %46 = vector.extract_strided_slice %43 {offsets = [0, 0], sizes = [8, 128], strides = [1, 1]} : vector<8x384xf32> to vector<8x128xf32>
    %47 = vector.extract_strided_slice %45 {offsets = [0, 0], sizes = [8, 128], strides = [1, 1]} : vector<8x384xf32> to vector<8x128xf32>
    %48 = arith.addf %46, %47 : vector<8x128xf32>
    %49 = arith.negf %48 : vector<8x128xf32>
    %50 = math.exp %49 : vector<8x128xf32>
    %cst_23 = arith.constant 1.000000e+00 : f32
    %51 = vector.broadcast %cst_23 : f32 to vector<8x128xf32>
    %52 = arith.addf %51, %50 : vector<8x128xf32>
    %53 = arith.divf %51, %52 : vector<8x128xf32>
    %54 = vector.extract_strided_slice %43 {offsets = [0, 128], sizes = [8, 128], strides = [1, 1]} : vector<8x384xf32> to vector<8x128xf32>
    %55 = vector.extract_strided_slice %45 {offsets = [0, 128], sizes = [8, 128], strides = [1, 1]} : vector<8x384xf32> to vector<8x128xf32>
    %56 = arith.addf %54, %55 : vector<8x128xf32>
    %57 = arith.negf %56 : vector<8x128xf32>
    %58 = math.exp %57 : vector<8x128xf32>
    %cst_24 = arith.constant 1.000000e+00 : f32
    %59 = vector.broadcast %cst_24 : f32 to vector<8x128xf32>
    %60 = arith.addf %59, %58 : vector<8x128xf32>
    %61 = arith.divf %59, %60 : vector<8x128xf32>
    %62 = vector.extract_strided_slice %43 {offsets = [0, 256], sizes = [8, 128], strides = [1, 1]} : vector<8x384xf32> to vector<8x128xf32>
    %63 = vector.extract_strided_slice %45 {offsets = [0, 256], sizes = [8, 128], strides = [1, 1]} : vector<8x384xf32> to vector<8x128xf32>
    %64 = arith.addf %63, %11 : vector<8x128xf32>
    %65 = arith.mulf %53, %64 : vector<8x128xf32>
    %66 = arith.addf %62, %65 : vector<8x128xf32>
    %67 = math.tanh %66 : vector<8x128xf32>
    %cst_25 = arith.constant 1.000000e+00 : f32
    %68 = vector.broadcast %cst_25 : f32 to vector<8x128xf32>
    %69 = arith.subf %68, %61 : vector<8x128xf32>
    %70 = arith.mulf %69, %67 : vector<8x128xf32>
    %71 = arith.mulf %61, %42 : vector<8x128xf32>
    %72 = arith.addf %70, %71 : vector<8x128xf32>
    %c16 = arith.constant 16 : index
    %c0_26 = arith.constant 0 : index
    %73 = vector.load %arg10[%c16, %c0_26] : memref<64x384xf32, #tpu.memory_space<vmem>>, vector<8x384xf32>
    %c0_27 = arith.constant 0 : index
    %c0_28 = arith.constant 0 : index
    %74 = vector.load %arg2[%c0_27, %c0_28] : memref<128x384xf32, #tpu.memory_space<vmem>>, vector<128x384xf32>
    %cst_29 = arith.constant dense<0.000000e+00> : vector<8x384xf32>
    %75 = tpu.matmul %72, %74, %cst_29 {dimension_numbers = #tpu.dot_dimension_numbers<[1], [0], [0], [1], [0, 0, 1, 1], [], []>} : vector<8x128xf32>, vector<128x384xf32>, vector<8x384xf32> -> vector<8x384xf32>
    %76 = vector.extract_strided_slice %73 {offsets = [0, 0], sizes = [8, 128], strides = [1, 1]} : vector<8x384xf32> to vector<8x128xf32>
    %77 = vector.extract_strided_slice %75 {offsets = [0, 0], sizes = [8, 128], strides = [1, 1]} : vector<8x384xf32> to vector<8x128xf32>
    %78 = arith.addf %76, %77 : vector<8x128xf32>
    %79 = arith.negf %78 : vector<8x128xf32>
    %80 = math.exp %79 : vector<8x128xf32>
    %cst_30 = arith.constant 1.000000e+00 : f32
    %81 = vector.broadcast %cst_30 : f32 to vector<8x128xf32>
    %82 = arith.addf %81, %80 : vector<8x128xf32>
    %83 = arith.divf %81, %82 : vector<8x128xf32>
    %84 = vector.extract_strided_slice %73 {offsets = [0, 128], sizes = [8, 128], strides = [1, 1]} : vector<8x384xf32> to vector<8x128xf32>
    %85 = vector.extract_strided_slice %75 {offsets = [0, 128], sizes = [8, 128], strides = [1, 1]} : vector<8x384xf32> to vector<8x128xf32>
    %86 = arith.addf %84, %85 : vector<8x128xf32>
    %87 = arith.negf %86 : vector<8x128xf32>
    %88 = math.exp %87 : vector<8x128xf32>
    %cst_31 = arith.constant 1.000000e+00 : f32
    %89 = vector.broadcast %cst_31 : f32 to vector<8x128xf32>
    %90 = arith.addf %89, %88 : vector<8x128xf32>
    %91 = arith.divf %89, %90 : vector<8x128xf32>
    %92 = vector.extract_strided_slice %73 {offsets = [0, 256], sizes = [8, 128], strides = [1, 1]} : vector<8x384xf32> to vector<8x128xf32>
    %93 = vector.extract_strided_slice %75 {offsets = [0, 256], sizes = [8, 128], strides = [1, 1]} : vector<8x384xf32> to vector<8x128xf32>
    %94 = arith.addf %93, %11 : vector<8x128xf32>
    %95 = arith.mulf %83, %94 : vector<8x128xf32>
    %96 = arith.addf %92, %95 : vector<8x128xf32>
    %97 = math.tanh %96 : vector<8x128xf32>
    %cst_32 = arith.constant 1.000000e+00 : f32
    %98 = vector.broadcast %cst_32 : f32 to vector<8x128xf32>
    %99 = arith.subf %98, %91 : vector<8x128xf32>
    %100 = arith.mulf %99, %97 : vector<8x128xf32>
    %101 = arith.mulf %91, %72 : vector<8x128xf32>
    %102 = arith.addf %100, %101 : vector<8x128xf32>
    %c24 = arith.constant 24 : index
    %c0_33 = arith.constant 0 : index
    %103 = vector.load %arg10[%c24, %c0_33] : memref<64x384xf32, #tpu.memory_space<vmem>>, vector<8x384xf32>
    %c0_34 = arith.constant 0 : index
    %c0_35 = arith.constant 0 : index
    %104 = vector.load %arg2[%c0_34, %c0_35] : memref<128x384xf32, #tpu.memory_space<vmem>>, vector<128x384xf32>
    %cst_36 = arith.constant dense<0.000000e+00> : vector<8x384xf32>
    %105 = tpu.matmul %102, %104, %cst_36 {dimension_numbers = #tpu.dot_dimension_numbers<[1], [0], [0], [1], [0, 0, 1, 1], [], []>} : vector<8x128xf32>, vector<128x384xf32>, vector<8x384xf32> -> vector<8x384xf32>
    %106 = vector.extract_strided_slice %103 {offsets = [0, 0], sizes = [8, 128], strides = [1, 1]} : vector<8x384xf32> to vector<8x128xf32>
    %107 = vector.extract_strided_slice %105 {offsets = [0, 0], sizes = [8, 128], strides = [1, 1]} : vector<8x384xf32> to vector<8x128xf32>
    %108 = arith.addf %106, %107 : vector<8x128xf32>
    %109 = arith.negf %108 : vector<8x128xf32>
    %110 = math.exp %109 : vector<8x128xf32>
    %cst_37 = arith.constant 1.000000e+00 : f32
    %111 = vector.broadcast %cst_37 : f32 to vector<8x128xf32>
    %112 = arith.addf %111, %110 : vector<8x128xf32>
    %113 = arith.divf %111, %112 : vector<8x128xf32>
    %114 = vector.extract_strided_slice %103 {offsets = [0, 128], sizes = [8, 128], strides = [1, 1]} : vector<8x384xf32> to vector<8x128xf32>
    %115 = vector.extract_strided_slice %105 {offsets = [0, 128], sizes = [8, 128], strides = [1, 1]} : vector<8x384xf32> to vector<8x128xf32>
    %116 = arith.addf %114, %115 : vector<8x128xf32>
    %117 = arith.negf %116 : vector<8x128xf32>
    %118 = math.exp %117 : vector<8x128xf32>
    %cst_38 = arith.constant 1.000000e+00 : f32
    %119 = vector.broadcast %cst_38 : f32 to vector<8x128xf32>
    %120 = arith.addf %119, %118 : vector<8x128xf32>
    %121 = arith.divf %119, %120 : vector<8x128xf32>
    %122 = vector.extract_strided_slice %103 {offsets = [0, 256], sizes = [8, 128], strides = [1, 1]} : vector<8x384xf32> to vector<8x128xf32>
    %123 = vector.extract_strided_slice %105 {offsets = [0, 256], sizes = [8, 128], strides = [1, 1]} : vector<8x384xf32> to vector<8x128xf32>
    %124 = arith.addf %123, %11 : vector<8x128xf32>
    %125 = arith.mulf %113, %124 : vector<8x128xf32>
    %126 = arith.addf %122, %125 : vector<8x128xf32>
    %127 = math.tanh %126 : vector<8x128xf32>
    %cst_39 = arith.constant 1.000000e+00 : f32
    %128 = vector.broadcast %cst_39 : f32 to vector<8x128xf32>
    %129 = arith.subf %128, %121 : vector<8x128xf32>
    %130 = arith.mulf %129, %127 : vector<8x128xf32>
    %131 = arith.mulf %121, %102 : vector<8x128xf32>
    %132 = arith.addf %130, %131 : vector<8x128xf32>
    %c32 = arith.constant 32 : index
    %c0_40 = arith.constant 0 : index
    %133 = vector.load %arg10[%c32, %c0_40] : memref<64x384xf32, #tpu.memory_space<vmem>>, vector<8x384xf32>
    %c0_41 = arith.constant 0 : index
    %c0_42 = arith.constant 0 : index
    %134 = vector.load %arg2[%c0_41, %c0_42] : memref<128x384xf32, #tpu.memory_space<vmem>>, vector<128x384xf32>
    %cst_43 = arith.constant dense<0.000000e+00> : vector<8x384xf32>
    %135 = tpu.matmul %132, %134, %cst_43 {dimension_numbers = #tpu.dot_dimension_numbers<[1], [0], [0], [1], [0, 0, 1, 1], [], []>} : vector<8x128xf32>, vector<128x384xf32>, vector<8x384xf32> -> vector<8x384xf32>
    %136 = vector.extract_strided_slice %133 {offsets = [0, 0], sizes = [8, 128], strides = [1, 1]} : vector<8x384xf32> to vector<8x128xf32>
    %137 = vector.extract_strided_slice %135 {offsets = [0, 0], sizes = [8, 128], strides = [1, 1]} : vector<8x384xf32> to vector<8x128xf32>
    %138 = arith.addf %136, %137 : vector<8x128xf32>
    %139 = arith.negf %138 : vector<8x128xf32>
    %140 = math.exp %139 : vector<8x128xf32>
    %cst_44 = arith.constant 1.000000e+00 : f32
    %141 = vector.broadcast %cst_44 : f32 to vector<8x128xf32>
    %142 = arith.addf %141, %140 : vector<8x128xf32>
    %143 = arith.divf %141, %142 : vector<8x128xf32>
    %144 = vector.extract_strided_slice %133 {offsets = [0, 128], sizes = [8, 128], strides = [1, 1]} : vector<8x384xf32> to vector<8x128xf32>
    %145 = vector.extract_strided_slice %135 {offsets = [0, 128], sizes = [8, 128], strides = [1, 1]} : vector<8x384xf32> to vector<8x128xf32>
    %146 = arith.addf %144, %145 : vector<8x128xf32>
    %147 = arith.negf %146 : vector<8x128xf32>
    %148 = math.exp %147 : vector<8x128xf32>
    %cst_45 = arith.constant 1.000000e+00 : f32
    %149 = vector.broadcast %cst_45 : f32 to vector<8x128xf32>
    %150 = arith.addf %149, %148 : vector<8x128xf32>
    %151 = arith.divf %149, %150 : vector<8x128xf32>
    %152 = vector.extract_strided_slice %133 {offsets = [0, 256], sizes = [8, 128], strides = [1, 1]} : vector<8x384xf32> to vector<8x128xf32>
    %153 = vector.extract_strided_slice %135 {offsets = [0, 256], sizes = [8, 128], strides = [1, 1]} : vector<8x384xf32> to vector<8x128xf32>
    %154 = arith.addf %153, %11 : vector<8x128xf32>
    %155 = arith.mulf %143, %154 : vector<8x128xf32>
    %156 = arith.addf %152, %155 : vector<8x128xf32>
    %157 = math.tanh %156 : vector<8x128xf32>
    %cst_46 = arith.constant 1.000000e+00 : f32
    %158 = vector.broadcast %cst_46 : f32 to vector<8x128xf32>
    %159 = arith.subf %158, %151 : vector<8x128xf32>
    %160 = arith.mulf %159, %157 : vector<8x128xf32>
    %161 = arith.mulf %151, %132 : vector<8x128xf32>
    %162 = arith.addf %160, %161 : vector<8x128xf32>
    %c40 = arith.constant 40 : index
    %c0_47 = arith.constant 0 : index
    %163 = vector.load %arg10[%c40, %c0_47] : memref<64x384xf32, #tpu.memory_space<vmem>>, vector<8x384xf32>
    %c0_48 = arith.constant 0 : index
    %c0_49 = arith.constant 0 : index
    %164 = vector.load %arg2[%c0_48, %c0_49] : memref<128x384xf32, #tpu.memory_space<vmem>>, vector<128x384xf32>
    %cst_50 = arith.constant dense<0.000000e+00> : vector<8x384xf32>
    %165 = tpu.matmul %162, %164, %cst_50 {dimension_numbers = #tpu.dot_dimension_numbers<[1], [0], [0], [1], [0, 0, 1, 1], [], []>} : vector<8x128xf32>, vector<128x384xf32>, vector<8x384xf32> -> vector<8x384xf32>
    %166 = vector.extract_strided_slice %163 {offsets = [0, 0], sizes = [8, 128], strides = [1, 1]} : vector<8x384xf32> to vector<8x128xf32>
    %167 = vector.extract_strided_slice %165 {offsets = [0, 0], sizes = [8, 128], strides = [1, 1]} : vector<8x384xf32> to vector<8x128xf32>
    %168 = arith.addf %166, %167 : vector<8x128xf32>
    %169 = arith.negf %168 : vector<8x128xf32>
    %170 = math.exp %169 : vector<8x128xf32>
    %cst_51 = arith.constant 1.000000e+00 : f32
    %171 = vector.broadcast %cst_51 : f32 to vector<8x128xf32>
    %172 = arith.addf %171, %170 : vector<8x128xf32>
    %173 = arith.divf %171, %172 : vector<8x128xf32>
    %174 = vector.extract_strided_slice %163 {offsets = [0, 128], sizes = [8, 128], strides = [1, 1]} : vector<8x384xf32> to vector<8x128xf32>
    %175 = vector.extract_strided_slice %165 {offsets = [0, 128], sizes = [8, 128], strides = [1, 1]} : vector<8x384xf32> to vector<8x128xf32>
    %176 = arith.addf %174, %175 : vector<8x128xf32>
    %177 = arith.negf %176 : vector<8x128xf32>
    %178 = math.exp %177 : vector<8x128xf32>
    %cst_52 = arith.constant 1.000000e+00 : f32
    %179 = vector.broadcast %cst_52 : f32 to vector<8x128xf32>
    %180 = arith.addf %179, %178 : vector<8x128xf32>
    %181 = arith.divf %179, %180 : vector<8x128xf32>
    %182 = vector.extract_strided_slice %163 {offsets = [0, 256], sizes = [8, 128], strides = [1, 1]} : vector<8x384xf32> to vector<8x128xf32>
    %183 = vector.extract_strided_slice %165 {offsets = [0, 256], sizes = [8, 128], strides = [1, 1]} : vector<8x384xf32> to vector<8x128xf32>
    %184 = arith.addf %183, %11 : vector<8x128xf32>
    %185 = arith.mulf %173, %184 : vector<8x128xf32>
    %186 = arith.addf %182, %185 : vector<8x128xf32>
    %187 = math.tanh %186 : vector<8x128xf32>
    %cst_53 = arith.constant 1.000000e+00 : f32
    %188 = vector.broadcast %cst_53 : f32 to vector<8x128xf32>
    %189 = arith.subf %188, %181 : vector<8x128xf32>
    %190 = arith.mulf %189, %187 : vector<8x128xf32>
    %191 = arith.mulf %181, %162 : vector<8x128xf32>
    %192 = arith.addf %190, %191 : vector<8x128xf32>
    %c48 = arith.constant 48 : index
    %c0_54 = arith.constant 0 : index
    %193 = vector.load %arg10[%c48, %c0_54] : memref<64x384xf32, #tpu.memory_space<vmem>>, vector<8x384xf32>
    %c0_55 = arith.constant 0 : index
    %c0_56 = arith.constant 0 : index
    %194 = vector.load %arg2[%c0_55, %c0_56] : memref<128x384xf32, #tpu.memory_space<vmem>>, vector<128x384xf32>
    %cst_57 = arith.constant dense<0.000000e+00> : vector<8x384xf32>
    %195 = tpu.matmul %192, %194, %cst_57 {dimension_numbers = #tpu.dot_dimension_numbers<[1], [0], [0], [1], [0, 0, 1, 1], [], []>} : vector<8x128xf32>, vector<128x384xf32>, vector<8x384xf32> -> vector<8x384xf32>
    %196 = vector.extract_strided_slice %193 {offsets = [0, 0], sizes = [8, 128], strides = [1, 1]} : vector<8x384xf32> to vector<8x128xf32>
    %197 = vector.extract_strided_slice %195 {offsets = [0, 0], sizes = [8, 128], strides = [1, 1]} : vector<8x384xf32> to vector<8x128xf32>
    %198 = arith.addf %196, %197 : vector<8x128xf32>
    %199 = arith.negf %198 : vector<8x128xf32>
    %200 = math.exp %199 : vector<8x128xf32>
    %cst_58 = arith.constant 1.000000e+00 : f32
    %201 = vector.broadcast %cst_58 : f32 to vector<8x128xf32>
    %202 = arith.addf %201, %200 : vector<8x128xf32>
    %203 = arith.divf %201, %202 : vector<8x128xf32>
    %204 = vector.extract_strided_slice %193 {offsets = [0, 128], sizes = [8, 128], strides = [1, 1]} : vector<8x384xf32> to vector<8x128xf32>
    %205 = vector.extract_strided_slice %195 {offsets = [0, 128], sizes = [8, 128], strides = [1, 1]} : vector<8x384xf32> to vector<8x128xf32>
    %206 = arith.addf %204, %205 : vector<8x128xf32>
    %207 = arith.negf %206 : vector<8x128xf32>
    %208 = math.exp %207 : vector<8x128xf32>
    %cst_59 = arith.constant 1.000000e+00 : f32
    %209 = vector.broadcast %cst_59 : f32 to vector<8x128xf32>
    %210 = arith.addf %209, %208 : vector<8x128xf32>
    %211 = arith.divf %209, %210 : vector<8x128xf32>
    %212 = vector.extract_strided_slice %193 {offsets = [0, 256], sizes = [8, 128], strides = [1, 1]} : vector<8x384xf32> to vector<8x128xf32>
    %213 = vector.extract_strided_slice %195 {offsets = [0, 256], sizes = [8, 128], strides = [1, 1]} : vector<8x384xf32> to vector<8x128xf32>
    %214 = arith.addf %213, %11 : vector<8x128xf32>
    %215 = arith.mulf %203, %214 : vector<8x128xf32>
    %216 = arith.addf %212, %215 : vector<8x128xf32>
    %217 = math.tanh %216 : vector<8x128xf32>
    %cst_60 = arith.constant 1.000000e+00 : f32
    %218 = vector.broadcast %cst_60 : f32 to vector<8x128xf32>
    %219 = arith.subf %218, %211 : vector<8x128xf32>
    %220 = arith.mulf %219, %217 : vector<8x128xf32>
    %221 = arith.mulf %211, %192 : vector<8x128xf32>
    %222 = arith.addf %220, %221 : vector<8x128xf32>
    %c56 = arith.constant 56 : index
    %c0_61 = arith.constant 0 : index
    %223 = vector.load %arg10[%c56, %c0_61] : memref<64x384xf32, #tpu.memory_space<vmem>>, vector<8x384xf32>
    %c0_62 = arith.constant 0 : index
    %c0_63 = arith.constant 0 : index
    %224 = vector.load %arg2[%c0_62, %c0_63] : memref<128x384xf32, #tpu.memory_space<vmem>>, vector<128x384xf32>
    %cst_64 = arith.constant dense<0.000000e+00> : vector<8x384xf32>
    %225 = tpu.matmul %222, %224, %cst_64 {dimension_numbers = #tpu.dot_dimension_numbers<[1], [0], [0], [1], [0, 0, 1, 1], [], []>} : vector<8x128xf32>, vector<128x384xf32>, vector<8x384xf32> -> vector<8x384xf32>
    %226 = vector.extract_strided_slice %223 {offsets = [0, 0], sizes = [8, 128], strides = [1, 1]} : vector<8x384xf32> to vector<8x128xf32>
    %227 = vector.extract_strided_slice %225 {offsets = [0, 0], sizes = [8, 128], strides = [1, 1]} : vector<8x384xf32> to vector<8x128xf32>
    %228 = arith.addf %226, %227 : vector<8x128xf32>
    %229 = arith.negf %228 : vector<8x128xf32>
    %230 = math.exp %229 : vector<8x128xf32>
    %cst_65 = arith.constant 1.000000e+00 : f32
    %231 = vector.broadcast %cst_65 : f32 to vector<8x128xf32>
    %232 = arith.addf %231, %230 : vector<8x128xf32>
    %233 = arith.divf %231, %232 : vector<8x128xf32>
    %234 = vector.extract_strided_slice %223 {offsets = [0, 128], sizes = [8, 128], strides = [1, 1]} : vector<8x384xf32> to vector<8x128xf32>
    %235 = vector.extract_strided_slice %225 {offsets = [0, 128], sizes = [8, 128], strides = [1, 1]} : vector<8x384xf32> to vector<8x128xf32>
    %236 = arith.addf %234, %235 : vector<8x128xf32>
    %237 = arith.negf %236 : vector<8x128xf32>
    %238 = math.exp %237 : vector<8x128xf32>
    %cst_66 = arith.constant 1.000000e+00 : f32
    %239 = vector.broadcast %cst_66 : f32 to vector<8x128xf32>
    %240 = arith.addf %239, %238 : vector<8x128xf32>
    %241 = arith.divf %239, %240 : vector<8x128xf32>
    %242 = vector.extract_strided_slice %223 {offsets = [0, 256], sizes = [8, 128], strides = [1, 1]} : vector<8x384xf32> to vector<8x128xf32>
    %243 = vector.extract_strided_slice %225 {offsets = [0, 256], sizes = [8, 128], strides = [1, 1]} : vector<8x384xf32> to vector<8x128xf32>
    %244 = arith.addf %243, %11 : vector<8x128xf32>
    %245 = arith.mulf %233, %244 : vector<8x128xf32>
    %246 = arith.addf %242, %245 : vector<8x128xf32>
    %247 = math.tanh %246 : vector<8x128xf32>
    %cst_67 = arith.constant 1.000000e+00 : f32
    %248 = vector.broadcast %cst_67 : f32 to vector<8x128xf32>
    %249 = arith.subf %248, %241 : vector<8x128xf32>
    %250 = arith.mulf %249, %247 : vector<8x128xf32>
    %251 = arith.mulf %241, %222 : vector<8x128xf32>
    %252 = arith.addf %250, %251 : vector<8x128xf32>
    %c0_68 = arith.constant 0 : index
    %c0_69 = arith.constant 0 : index
    %253 = vector.load %arg5[%c0_68, %c0_69] : memref<128x128xf32, #tpu.memory_space<vmem>>, vector<128x128xf32>
    %cst_70 = arith.constant dense<0.000000e+00> : vector<8x128xf32>
    %254 = tpu.matmul %252, %253, %cst_70 {dimension_numbers = #tpu.dot_dimension_numbers<[1], [0], [0], [1], [0, 0, 1, 1], [], []>} : vector<8x128xf32>, vector<128x128xf32>, vector<8x128xf32> -> vector<8x128xf32>
    %c0_71 = arith.constant 0 : index
    %c0_72 = arith.constant 0 : index
    %255 = vector.load %arg6[%c0_71, %c0_72] : memref<1x128xf32, #tpu.memory_space<vmem>>, vector<1x128xf32>
    %256 = vector.broadcast %255 : vector<1x128xf32> to vector<8x128xf32>
    %257 = arith.addf %254, %256 : vector<8x128xf32>
    %cst_73 = arith.constant 0.000000e+00 : f32
    %258 = vector.broadcast %cst_73 : f32 to vector<8x128xf32>
    %259 = arith.maximumf %257, %258 : vector<8x128xf32>
    %c0_74 = arith.constant 0 : index
    %c0_75 = arith.constant 0 : index
    %260 = vector.load %arg7[%c0_74, %c0_75] : memref<128x128xf32, #tpu.memory_space<vmem>>, vector<128x128xf32>
    %cst_76 = arith.constant dense<0.000000e+00> : vector<8x128xf32>
    %261 = tpu.matmul %259, %260, %cst_76 {dimension_numbers = #tpu.dot_dimension_numbers<[1], [0], [0], [1], [0, 0, 1, 1], [], []>} : vector<8x128xf32>, vector<128x128xf32>, vector<8x128xf32> -> vector<8x128xf32>
    %c0_77 = arith.constant 0 : index
    %c0_78 = arith.constant 0 : index
    %262 = vector.load %arg8[%c0_77, %c0_78] : memref<1x128xf32, #tpu.memory_space<vmem>>, vector<1x128xf32>
    %263 = vector.broadcast %262 : vector<1x128xf32> to vector<8x128xf32>
    %264 = arith.addf %261, %263 : vector<8x128xf32>
    %c0_79 = arith.constant 0 : index
    %c0_80 = arith.constant 0 : index
    %265 = vector.load %arg9[%c0_79, %c0_80] : memref<8x128xf32, #tpu.memory_space<vmem>>, vector<8x128xf32>
    tpu.vector_store %arg9[%c0_79, %c0_80], %264 {strides = array<i32>} : memref<8x128xf32, #tpu.memory_space<vmem>>, vector<8x128xf32>,
    return
  }
}

</mosaic_0001>

<llo_original>
// kernel: dqn_forward_pallas.1
$region0: #{dqn_forward_pallas.1}
  #allocation0 [shape = 'u32[]', space=smem, size = 0x4, offset = 0x4, fixed_abs, tag = 'smem constant byte address 0x4 - core index']
  #allocation1 [shape = 'u32[144,128]{1,0:T(1,128)}', space=vmem, size = 0x12000, scoped, tag = 'internal scratch']
  #allocation2 [shape = 'f32[64,384]{1,0:T(8,128)}', space=vmem, size = 0x18000, scoped, tag = 'scratch operand']
  %s0 = inlined_call_operand.vmem [shape: f32[8,8,16], index: 0, kind: input, shape index: {}]
  %s1 = inlined_call_operand.vmem [shape: f32[16,384], index: 1, kind: input, shape index: {}]
  %s2 = inlined_call_operand.hbm [shape: f32[128,384], index: 2, kind: input, shape index: {}]
  %s3 = inlined_call_operand.vmem [shape: f32[1,384], index: 3, kind: input, shape index: {}]
  %s4 = inlined_call_operand.vmem [shape: f32[1,128], index: 4, kind: input, shape index: {}]
  %s5 = inlined_call_operand.hbm [shape: f32[128,128], index: 5, kind: input, shape index: {}]
  %s6 = inlined_call_operand.vmem [shape: f32[1,128], index: 6, kind: input, shape index: {}]
  %s7 = inlined_call_operand.hbm [shape: f32[128,128], index: 7, kind: input, shape index: {}]
  %s8 = inlined_call_operand.vmem [shape: f32[1,128], index: 8, kind: input, shape index: {}]
  %s9 = inlined_call_operand.vmem [shape: f32[8,128], index: 9, kind: output, shape index: {}]
  %s10 = sld [smem:[#allocation0]]
  $region58: #{dqn_forward_pallas.1} parent=0
    _
  %s12 = ssub.s32 1, %s10
  %s13 = scalar_select 0, %s12, %s10
  $region1: #{dqn_forward_pallas.1} parent=0
    #allocation3 [shape = 'u8[196608]{0}', space=vmem, size = 0x30000, scoped, tag = 'input window, operand 2, single buffered']
    #allocation4 [shape = 's32[1]{0}', space=sflag, size = 0x4, scoped, tag = 'scoped memory for dqn_forward_pallas.1']
    #allocation5 [shape = 'u8[65536]{0}', space=vmem, size = 0x10000, scoped, tag = 'input window, operand 5, single buffered']
    #allocation6 [shape = 's32[1]{0}', space=sflag, size = 0x4, scoped, tag = 'scoped memory for dqn_forward_pallas.1']
    #allocation7 [shape = 'u8[65536]{0}', space=vmem, size = 0x10000, scoped, tag = 'input window, operand 7, single buffered']
    %14 = vsyncpa [#allocation4], 0
    %15 = vsyncpa [#allocation6], 0
    // Predicated region
    $region2: #{dqn_forward_pallas.1} parent=1 // pred_check
      _
    $region3: #{dqn_forward_pallas.1} parent=1 // pred_check_branch
      %17 = sbr.rel (0) target = $region5
    $region4: #{dqn_forward_pallas.1} parent=1 // pred_region
      _
    $region5: #{dqn_forward_pallas.1} parent=1 // pred_fallthru
      _
    // Predicated region
    $region6: #{dqn_forward_pallas.1} parent=1 // pred_check
      _
    $region7: #{dqn_forward_pallas.1} parent=1 // pred_check_branch
      %19 = sbr.rel (0) target = $region9
    $region8: #{dqn_forward_pallas.1} parent=1 // pred_region
      _
    $region9: #{dqn_forward_pallas.1} parent=1 // pred_fallthru
      _
    // Predicated region
    $region10: #{dqn_forward_pallas.1} parent=1 // pred_check
      _
    $region11: #{dqn_forward_pallas.1} parent=1 // pred_check_branch
      %21 = sbr.rel (0) target = $region13
    $region12: #{dqn_forward_pallas.1} parent=1 // pred_region
      %s23 = ssub.s32 6144, 6144
      %24 = vsyncadd [#allocation4], %s23
      %s25 = sshll.u32 [#allocation3], 4
      %s26 = int_to_ptr.vmem [resolvable:$true] %s25
      %31 = dma.hbm_to_vmem [thread:$0]  %s2, 6144, %s26, [#allocation4], 384, 384, 24
    $region13: #{dqn_forward_pallas.1} parent=1 // pred_fallthru
      _
    // Predicated region
    $region14: #{dqn_forward_pallas.1} parent=1 // pred_check
      _
    $region15: #{dqn_forward_pallas.1} parent=1 // pred_check_branch
      %33 = sbr.rel (0) target = $region17
    $region16: #{dqn_forward_pallas.1} parent=1 // pred_region
      _
    $region17: #{dqn_forward_pallas.1} parent=1 // pred_fallthru
      _
    // Predicated region
    $region18: #{dqn_forward_pallas.1} parent=1 // pred_check
      _
    $region19: #{dqn_forward_pallas.1} parent=1 // pred_check_branch
      %35 = sbr.rel (0) target = $region21
    $region20: #{dqn_forward_pallas.1} parent=1 // pred_region
      _
    $region21: #{dqn_forward_pallas.1} parent=1 // pred_fallthru
      _
    // Predicated region
    $region22: #{dqn_forward_pallas.1} parent=1 // pred_check
      _
    $region23: #{dqn_forward_pallas.1} parent=1 // pred_check_branch
      %37 = sbr.rel (0) target = $region25
    $region24: #{dqn_forward_pallas.1} parent=1 // pred_region
      %s39 = ssub.s32 2048, 2048
      %40 = vsyncadd [#allocation6], %s39
      %s41 = sshll.u32 [#allocation5], 4
      %s42 = int_to_ptr.vmem [resolvable:$true] %s41
      %47 = dma.hbm_to_vmem [thread:$0]  %s5, 2048, %s42, [#allocation6], 128, 128, 8
    $region25: #{dqn_forward_pallas.1} parent=1 // pred_fallthru
      _
    // Predicated region
    $region26: #{dqn_forward_pallas.1} parent=1 // pred_check
      _
    $region27: #{dqn_forward_pallas.1} parent=1 // pred_check_branch
      %49 = sbr.rel (0) target = $region29
    $region28: #{dqn_forward_pallas.1} parent=1 // pred_region
      _
    $region29: #{dqn_forward_pallas.1} parent=1 // pred_fallthru
      _
    // Predicated region
    $region30: #{dqn_forward_pallas.1} parent=1 // pred_check
      _
    $region31: #{dqn_forward_pallas.1} parent=1 // pred_check_branch
      %51 = sbr.rel (0) target = $region33
    $region32: #{dqn_forward_pallas.1} parent=1 // pred_region
      %s53 = ssub.s32 2048, 2048
      %54 = vsyncadd [#allocation6], %s53
      %s55 = sshll.u32 [#allocation7], 4
      %s56 = int_to_ptr.vmem [resolvable:$true] %s55
      %61 = dma.hbm_to_vmem [thread:$0]  %s7, 2048, %s56, [#allocation6], 128, 128, 8
    $region33: #{dqn_forward_pallas.1} parent=1 // pred_fallthru
      _
    // Predicated region
    $region34: #{dqn_forward_pallas.1} parent=1 // pred_check
      _
    $region35: #{dqn_forward_pallas.1} parent=1 // pred_check_branch
      %63 = sbr.rel (0) target = $region37
    $region36: #{dqn_forward_pallas.1} parent=1 // pred_region
      _
    $region37: #{dqn_forward_pallas.1} parent=1 // pred_fallthru
      _
    // Predicated region
    $region38: #{dqn_forward_pallas.1} parent=1 // pred_check
      _
    $region39: #{dqn_forward_pallas.1} parent=1 // pred_check_branch
      %65 = sbr.rel (0) target = $region41
    $region40: #{dqn_forward_pallas.1} parent=1 // pred_region
      %66 = dma.done [#allocation4], 6144
    $region41: #{dqn_forward_pallas.1} parent=1 // pred_fallthru
      _
    // Predicated region
    $region42: #{dqn_forward_pallas.1} parent=1 // pred_check
      _
    $region43: #{dqn_forward_pallas.1} parent=1 // pred_check_branch
      %68 = sbr.rel (0) target = $region45
    $region44: #{dqn_forward_pallas.1} parent=1 // pred_region
      %69 = dma.done [#allocation6], 2048
    $region45: #{dqn_forward_pallas.1} parent=1 // pred_fallthru
      _
    // Predicated region
    $region46: #{dqn_forward_pallas.1} parent=1 // pred_check
      _
    $region47: #{dqn_forward_pallas.1} parent=1 // pred_check_branch
      %71 = sbr.rel (0) target = $region49
    $region48: #{dqn_forward_pallas.1} parent=1 // pred_region
      %72 = dma.done [#allocation6], 2048
    $region49: #{dqn_forward_pallas.1} parent=1 // pred_fallthru
      _
    %v73 = vld [vmem:[%s0] sm:$0xff]
    %v74 = vld [vmem:[%s0 + $0x8] sm:$0xff]
    %v75 = vld [vmem:[%s0 + $0x10] sm:$0xff]
    %v76 = vld [vmem:[%s0 + $0x18] sm:$0xff]
    %v77 = vld [vmem:[%s0 + $0x20] sm:$0xff]
    %v78 = vld [vmem:[%s0 + $0x28] sm:$0xff]
    %v79 = vld [vmem:[%s0 + $0x30] sm:$0xff]
    %v80 = vld [vmem:[%s0 + $0x38] sm:$0xff]
    %v81 = vld [vmem:[%s1] sm:$0xff]
    %v82 = vld [vmem:[%s1 + $0x8] sm:$0xff]
    %v83 = vld [vmem:[%s1 + $0x10] sm:$0xff]
    %v84 = vld [vmem:[%s1 + $0x18] sm:$0xff]
    %v85 = vld [vmem:[%s1 + $0x20] sm:$0xff]
    %v86 = vld [vmem:[%s1 + $0x28] sm:$0xff]
    %v87 = vld [vmem:[%s3] sm:$0x7]
    %v89 = vlaneseq
    %v90 = vshrl.u32 %v89, 7
    %v91 = vsub.s32 0, %v90
    %v92 = vrot.slane %v87, %v91
    %v93 = vlaneseq
    %v94 = vshrl.u32 %v93, 7
    %v95 = vsub.s32 1, %v94
    %v96 = vrot.slane %v87, %v95
    %v97 = vlaneseq
    %v98 = vshrl.u32 %v97, 7
    %v99 = vsub.s32 2, %v98
    %v100 = vrot.slane %v87, %v99
    %vm104 = vcmask 130048
    %v106 = vsel %vm104, %v73, 0
    %v109 = vsel %vm104, %v74, 0
    %v112 = vsel %vm104, %v75, 0
    %v115 = vsel %vm104, %v76, 0
    %v118 = vsel %vm104, %v77, 0
    %v121 = vsel %vm104, %v78, 0
    %v124 = vsel %vm104, %v79, 0
    %v127 = vsel %vm104, %v80, 0
    %129 = vmatprep.subr.mxu0 0.0
    %130 = vmatpush1.msra.mxu0 0.0
    %131 = vmatprep.subr.mxu0 0.0
    %132 = vmatpush1.msra.mxu0 0.0
    %133 = vmatprep.subr.mxu0 0.0
    %134 = vmatpush1.msra.mxu0 0.0
    %135 = vmatprep.subr.mxu0 0.0
    %136 = vmatpush1.msra.mxu0 0.0
    %137 = vmatprep.subr.mxu0 0.0
    %138 = vmatpush1.msra.mxu0 0.0
    %139 = vmatprep.subr.mxu0 0.0
    %140 = vmatpush1.msra.mxu0 0.0
    %141 = vmatprep.subr.mxu0 0.0
    %142 = vmatpush1.msra.mxu0 0.0
    %143 = vmatprep.subr.mxu0 0.0
    %144 = vmatpush1.msra.mxu0 0.0
    %145 = vmatprep.subr.mxu0 0.0
    %146 = vmatpush1.msra.mxu0 0.0
    %147 = vmatprep.subr.mxu0 0.0
    %148 = vmatpush1.msra.mxu0 0.0
    %149 = vmatprep.subr.mxu0 0.0
    %150 = vmatpush1.msra.mxu0 0.0
    %151 = vmatprep.subr.mxu0 0.0
    %152 = vmatpush1.msra.mxu0 0.0
    %153 = vmatprep.subr.mxu0 0.0
    %154 = vmatpush1.msra.mxu0 0.0
    %155 = vmatprep.subr.mxu0 0.0
    %156 = vmatpush1.msra.mxu0 0.0
    %157 = vmatprep.subr.mxu0 %v85
    %158 = vmatpush1.msra.mxu0 %v84
    %159 = vmatprep.subr.mxu0 %v82
    %160 = vmatpush1.msra.mxu0 %v81
    %161 = vmatprep.subr.mxu0 0.0
    %162 = vmatpush2.msra.mxu0 0.0
    %163 = vmatprep.subr.mxu0 0.0
    %164 = vmatpush2.msra.mxu0 0.0
    %165 = vmatprep.subr.mxu0 0.0
    %166 = vmatpush2.msra.mxu0 0.0
    %167 = vmatprep.subr.mxu0 0.0
    %168 = vmatpush2.msra.mxu0 0.0
    %169 = vmatprep.subr.mxu0 0.0
    %170 = vmatpush2.msra.mxu0 0.0
    %171 = vmatprep.subr.mxu0 0.0
    %172 = vmatpush2.msra.mxu0 0.0
    %173 = vmatprep.subr.mxu0 0.0
    %174 = vmatpush2.msra.mxu0 0.0
    %175 = vmatprep.subr.mxu0 0.0
    %176 = vmatpush2.msra.mxu0 0.0
    %177 = vmatprep.subr.mxu0 0.0
    %178 = vmatpush2.msra.mxu0 0.0
    %179 = vmatprep.subr.mxu0 0.0
    %180 = vmatpush2.msra.mxu0 0.0
    %181 = vmatprep.subr.mxu0 0.0
    %182 = vmatpush2.msra.mxu0 0.0
    %183 = vmatprep.subr.mxu0 0.0
    %184 = vmatpush2.msra.mxu0 0.0
    %185 = vmatprep.subr.mxu0 0.0
    %186 = vmatpush2.msra.mxu0 0.0
    %187 = vmatprep.subr.mxu0 0.0
    %188 = vmatpush2.msra.mxu0 0.0
    %189 = vmatprep.subr.mxu0 0.0
    %190 = vmatpush2.msra.mxu0 0.0
    %191 = vmatprep.subr.mxu0 0.0
    %192 = vmatpush2.msra.mxu0 0.0
    %193 = vmatprep.mubr.f32.mxu0 0.0
    %194 = vmatmul.mubr.f32.gmra.mxu0 %v106
    %v195 = vpop.f32.mrf.mxu0
    %v196 = vadd.f32 %v92, %v195
    %v197 = vpop.f32.mrf.mxu0
    %v198 = vadd.f32 %v96, %v197
    %199 = vmatprep.mubr.f32.mxu0 0.0
    %200 = vmatmul.mubr.f32.gmra.mxu0 %v109
    %v201 = vpop.f32.mrf.mxu0
    %v202 = vadd.f32 %v92, %v201
    %v203 = vpop.f32.mrf.mxu0
    %v204 = vadd.f32 %v96, %v203
    %205 = vmatprep.mubr.f32.mxu0 0.0
    %206 = vmatmul.mubr.f32.gmra.mxu0 %v112
    %v207 = vpop.f32.mrf.mxu0
    %v208 = vadd.f32 %v92, %v207
    %v209 = vpop.f32.mrf.mxu0
    %v210 = vadd.f32 %v96, %v209
    %211 = vmatprep.mubr.f32.mxu0 0.0
    %212 = vmatmul.mubr.f32.gmra.mxu0 %v115
    %v213 = vpop.f32.mrf.mxu0
    %v214 = vadd.f32 %v92, %v213
    %v215 = vpop.f32.mrf.mxu0
    %v216 = vadd.f32 %v96, %v215
    %217 = vmatprep.mubr.f32.mxu0 0.0
    %218 = vmatmul.mubr.f32.gmra.mxu0 %v118
    %v219 = vpop.f32.mrf.mxu0
    %v220 = vadd.f32 %v92, %v219
    %v221 = vpop.f32.mrf.mxu0
    %v222 = vadd.f32 %v96, %v221
    %223 = vmatprep.mubr.f32.mxu0 0.0
    %224 = vmatmul.mubr.f32.gmra.mxu0 %v121
    %v225 = vpop.f32.mrf.mxu0
    %v226 = vadd.f32 %v92, %v225
    %v227 = vpop.f32.mrf.mxu0
    %v228 = vadd.f32 %v96, %v227
    %229 = vmatprep.mubr.f32.mxu0 0.0
    %230 = vmatmul.mubr.f32.gmra.mxu0 %v124
    %v231 = vpop.f32.mrf.mxu0
    %v232 = vadd.f32 %v92, %v231
    %v233 = vpop.f32.mrf.mxu0
    %v234 = vadd.f32 %v96, %v233
    %235 = vmatprep.mubr.f32.mxu0 0.0
    %236 = vmatmul.mubr.f32.gmra.mxu0 %v127
    %v237 = vpop.f32.mrf.mxu0
    %v238 = vadd.f32 %v92, %v237
    %v239 = vpop.f32.mrf.mxu0
    %v240 = vadd.f32 %v96, %v239
    %241 = vdwg.mxu0
    %242 = vmatprep.subr.mxu0 0.0
    %243 = vmatpush1.msra.mxu0 0.0
    %244 = vmatprep.subr.mxu0 0.0
    %245 = vmatpush1.msra.mxu0 0.0
    %246 = vmatprep.subr.mxu0 0.0
    %247 = vmatpush1.msra.mxu0 0.0
    %248 = vmatprep.subr.mxu0 0.0
    %249 = vmatpush1.msra.mxu0 0.0
    %250 = vmatprep.subr.mxu0 0.0
    %251 = vmatpush1.msra.mxu0 0.0
    %252 = vmatprep.subr.mxu0 0.0
    %253 = vmatpush1.msra.mxu0 0.0
    %254 = vmatprep.subr.mxu0 0.0
    %255 = vmatpush1.msra.mxu0 0.0
    %256 = vmatprep.subr.mxu0 0.0
    %257 = vmatpush1.msra.mxu0 0.0
    %258 = vmatprep.subr.mxu0 0.0
    %259 = vmatpush1.msra.mxu0 0.0
    %260 = vmatprep.subr.mxu0 0.0
    %261 = vmatpush1.msra.mxu0 0.0
    %262 = vmatprep.subr.mxu0 0.0
    %263 = vmatpush1.msra.mxu0 0.0
    %264 = vmatprep.subr.mxu0 0.0
    %265 = vmatpush1.msra.mxu0 0.0
    %266 = vmatprep.subr.mxu0 0.0
    %267 = vmatpush1.msra.mxu0 0.0
    %268 = vmatprep.subr.mxu0 0.0
    %269 = vmatpush1.msra.mxu0 0.0
    %270 = vmatprep.subr.mxu0 0.0
    %271 = vmatpush1.msra.mxu0 %v86
    %272 = vmatprep.subr.mxu0 0.0
    %273 = vmatpush1.msra.mxu0 %v83
    %274 = vmatprep.subr.mxu0 0.0
    %275 = vmatpush2.msra.mxu0 0.0
    %276 = vmatprep.subr.mxu0 0.0
    %277 = vmatpush2.msra.mxu0 0.0
    %278 = vmatprep.subr.mxu0 0.0
    %279 = vmatpush2.msra.mxu0 0.0
    %280 = vmatprep.subr.mxu0 0.0
    %281 = vmatpush2.msra.mxu0 0.0
    %282 = vmatprep.subr.mxu0 0.0
    %283 = vmatpush2.msra.mxu0 0.0
    %284 = vmatprep.subr.mxu0 0.0
    %285 = vmatpush2.msra.mxu0 0.0
    %286 = vmatprep.subr.mxu0 0.0
    %287 = vmatpush2.msra.mxu0 0.0
    %288 = vmatprep.subr.mxu0 0.0
    %289 = vmatpush2.msra.mxu0 0.0
    %290 = vmatprep.subr.mxu0 0.0
    %291 = vmatpush2.msra.mxu0 0.0
    %292 = vmatprep.subr.mxu0 0.0
    %293 = vmatpush2.msra.mxu0 0.0
    %294 = vmatprep.subr.mxu0 0.0
    %295 = vmatpush2.msra.mxu0 0.0
    %296 = vmatprep.subr.mxu0 0.0
    %297 = vmatpush2.msra.mxu0 0.0
    %298 = vmatprep.subr.mxu0 0.0
    %299 = vmatpush2.msra.mxu0 0.0
    %300 = vmatprep.subr.mxu0 0.0
    %301 = vmatpush2.msra.mxu0 0.0
    %302 = vmatprep.subr.mxu0 0.0
    %303 = vmatpush2.msra.mxu0 0.0
    %304 = vmatprep.subr.mxu0 0.0
    %305 = vmatpush2.msra.mxu0 0.0
    %306 = vmatprep.mubr.f32.mxu0 0.0
    %307 = vmatmul.mubr.f32.gmra.mxu0 %v106
    %v308 = vpop.f32.mrf.mxu0
    %v309 = vadd.f32 %v100, %v308
    %v310 = vpop.f32.mrf.mxu0
    %311 = vmatprep.mubr.f32.mxu0 0.0
    %312 = vmatmul.mubr.f32.gmra.mxu0 %v109
    %v313 = vpop.f32.mrf.mxu0
    %v314 = vadd.f32 %v100, %v313
    %v315 = vpop.f32.mrf.mxu0
    %316 = vmatprep.mubr.f32.mxu0 0.0
    %317 = vmatmul.mubr.f32.gmra.mxu0 %v112
    %v318 = vpop.f32.mrf.mxu0
    %v319 = vadd.f32 %v100, %v318
    %v320 = vpop.f32.mrf.mxu0
    %321 = vmatprep.mubr.f32.mxu0 0.0
    %322 = vmatmul.mubr.f32.gmra.mxu0 %v115
    %v323 = vpop.f32.mrf.mxu0
    %v324 = vadd.f32 %v100, %v323
    %v325 = vpop.f32.mrf.mxu0
    %326 = vmatprep.mubr.f32.mxu0 0.0
    %327 = vmatmul.mubr.f32.gmra.mxu0 %v118
    %v328 = vpop.f32.mrf.mxu0
    %v329 = vadd.f32 %v100, %v328
    %v330 = vpop.f32.mrf.mxu0
    %331 = vmatprep.mubr.f32.mxu0 0.0
    %332 = vmatmul.mubr.f32.gmra.mxu0 %v121
    %v333 = vpop.f32.mrf.mxu0
    %v334 = vadd.f32 %v100, %v333
    %v335 = vpop.f32.mrf.mxu0
    %336 = vmatprep.mubr.f32.mxu0 0.0
    %337 = vmatmul.mubr.f32.gmra.mxu0 %v124
    %v338 = vpop.f32.mrf.mxu0
    %v339 = vadd.f32 %v100, %v338
    %v340 = vpop.f32.mrf.mxu0
    %341 = vmatprep.mubr.f32.mxu0 0.0
    %342 = vmatmul.mubr.f32.gmra.mxu0 %v127
    %v343 = vpop.f32.mrf.mxu0
    %v344 = vadd.f32 %v100, %v343
    %v345 = vpop.f32.mrf.mxu0
    %346 = vdwg.mxu0
    %347 = vst [vmem:[#allocation2] sm:$0xff] %v196
    %348 = vst [vmem:[#allocation2 + $0x8] sm:$0xff] %v198
    %349 = vst [vmem:[#allocation2 + $0x10] sm:$0xff] %v309
    %350 = vst [vmem:[#allocation2 + $0x18] sm:$0xff] %v202
    %351 = vst [vmem:[#allocation2 + $0x20] sm:$0xff] %v204
    %352 = vst [vmem:[#allocation2 + $0x28] sm:$0xff] %v314
    %353 = vst [vmem:[#allocation2 + $0x30] sm:$0xff] %v208
    %354 = vst [vmem:[#allocation2 + $0x38] sm:$0xff] %v210
    %355 = vst [vmem:[#allocation2 + $0x40] sm:$0xff] %v319
    %356 = vst [vmem:[#allocation2 + $0x48] sm:$0xff] %v214
    %357 = vst [vmem:[#allocation2 + $0x50] sm:$0xff] %v216
    %358 = vst [vmem:[#allocation2 + $0x58] sm:$0xff] %v324
    %359 = vst [vmem:[#allocation2 + $0x60] sm:$0xff] %v220
    %360 = vst [vmem:[#allocation2 + $0x68] sm:$0xff] %v222
    %361 = vst [vmem:[#allocation2 + $0x70] sm:$0xff] %v329
    %362 = vst [vmem:[#allocation2 + $0x78] sm:$0xff] %v226
    %363 = vst [vmem:[#allocation2 + $0x80] sm:$0xff] %v228
    %364 = vst [vmem:[#allocation2 + $0x88] sm:$0xff] %v334
    %365 = vst [vmem:[#allocation2 + $0x90] sm:$0xff] %v232
    %366 = vst [vmem:[#allocation2 + $0x98] sm:$0xff] %v234
    %367 = vst [vmem:[#allocation2 + $0xa0] sm:$0xff] %v339
    %368 = vst [vmem:[#allocation2 + $0xa8] sm:$0xff] %v238
    %369 = vst [vmem:[#allocation2 + $0xb0] sm:$0xff] %v240
    %370 = vst [vmem:[#allocation2 + $0xb8] sm:$0xff] %v344
    %v371 = vld [vmem:[%s4] sm:$0x1]
    %v373 = vlaneseq
    %v374 = vshrl.u32 %v373, 7
    %v375 = vsub.s32 0, %v374
    %v376 = vrot.slane %v371, %v375
    %v378 = vld [vmem:[#allocation2] sm:$0xff]
    %v379 = vld [vmem:[#allocation2 + $0x8] sm:$0xff]
    %v380 = vld [vmem:[#allocation2 + $0x10] sm:$0xff]
    %v381 = vld [vmem:[#allocation3] sm:$0xff]
    %v382 = vld [vmem:[#allocation3 + $0x8] sm:$0xff]
    %v383 = vld [vmem:[#allocation3 + $0x10] sm:$0xff]
    %v384 = vld [vmem:[#allocation3 + $0x18] sm:$0xff]
    %v385 = vld [vmem:[#allocation3 + $0x20] sm:$0xff]
    %v386 = vld [vmem:[#allocation3 + $0x28] sm:$0xff]
    %v387 = vld [vmem:[#allocation3 + $0x30] sm:$0xff]
    %v388 = vld [vmem:[#allocation3 + $0x38] sm:$0xff]
    %v389 = vld [vmem:[#allocation3 + $0x40] sm:$0xff]
    %v390 = vld [vmem:[#allocation3 + $0x48] sm:$0xff]
    %v391 = vld [vmem:[#allocation3 + $0x50] sm:$0xff]
    %v392 = vld [vmem:[#allocation3 + $0x58] sm:$0xff]
    %v393 = vld [vmem:[#allocation3 + $0x60] sm:$0xff]
    %v394 = vld [vmem:[#allocation3 + $0x68] sm:$0xff]
    %v395 = vld [vmem:[#allocation3 + $0x70] sm:$0xff]
    %v396 = vld [vmem:[#allocation3 + $0x78] sm:$0xff]
    %v397 = vld [vmem:[#allocation3 + $0x80] sm:$0xff]
    %v398 = vld [vmem:[#allocation3 + $0x88] sm:$0xff]
    %v399 = vld [vmem:[#allocation3 + $0x90] sm:$0xff]
    %v400 = vld [vmem:[#allocation3 + $0x98] sm:$0xff]
    %v401 = vld [vmem:[#allocation3 + $0xa0] sm:$0xff]
    %v402 = vld [vmem:[#allocation3 + $0xa8] sm:$0xff]
    %v403 = vld [vmem:[#allocation3 + $0xb0] sm:$0xff]
    %v404 = vld [vmem:[#allocation3 + $0xb8] sm:$0xff]
    %v405 = vld [vmem:[#allocation3 + $0xc0] sm:$0xff]
    %v406 = vld [vmem:[#allocation3 + $0xc8] sm:$0xff]
    %v407 = vld [vmem:[#allocation3 + $0xd0] sm:$0xff]
    %v408 = vld [vmem:[#allocation3 + $0xd8] sm:$0xff]
    %v409 = vld [vmem:[#allocation3 + $0xe0] sm:$0xff]
    %v410 = vld [vmem:[#allocation3 + $0xe8] sm:$0xff]
    %v411 = vld [vmem:[#allocation3 + $0xf0] sm:$0xff]
    %v412 = vld [vmem:[#allocation3 + $0xf8] sm:$0xff]
    %v413 = vld [vmem:[#allocation3 + $0x100] sm:$0xff]
    %v414 = vld [vmem:[#allocation3 + $0x108] sm:$0xff]
    %v415 = vld [vmem:[#allocation3 + $0x110] sm:$0xff]
    %v416 = vld [vmem:[#allocation3 + $0x118] sm:$0xff]
    %v417 = vld [vmem:[#allocation3 + $0x120] sm:$0xff]
    %v418 = vld [vmem:[#allocation3 + $0x128] sm:$0xff]
    %v419 = vld [vmem:[#allocation3 + $0x130] sm:$0xff]
    %v420 = vld [vmem:[#allocation3 + $0x138] sm:$0xff]
    %v421 = vld [vmem:[#allocation3 + $0x140] sm:$0xff]
    %v422 = vld [vmem:[#allocation3 + $0x148] sm:$0xff]
    %v423 = vld [vmem:[#allocation3 + $0x150] sm:$0xff]
    %v424 = vld [vmem:[#allocation3 + $0x158] sm:$0xff]
    %v425 = vld [vmem:[#allocation3 + $0x160] sm:$0xff]
    %v426 = vld [vmem:[#allocation3 + $0x168] sm:$0xff]
    %v427 = vld [vmem:[#allocation3 + $0x170] sm:$0xff]
    %v428 = vld [vmem:[#allocation3 + $0x178] sm:$0xff]
    %429 = vmatprep.subr.mxu0 %v427
    %430 = vmatpush1.msra.mxu0 %v426
    %431 = vmatprep.subr.mxu0 %v424
    %432 = vmatpush1.msra.mxu0 %v423
    %433 = vmatprep.subr.mxu0 %v421
    %434 = vmatpush1.msra.mxu0 %v420
    %435 = vmatprep.subr.mxu0 %v418
    %436 = vmatpush1.msra.mxu0 %v417
    %437 = vmatprep.subr.mxu0 %v415
    %438 = vmatpush1.msra.mxu0 %v414
    %439 = vmatprep.subr.mxu0 %v412
    %440 = vmatpush1.msra.mxu0 %v411
    %441 = vmatprep.subr.mxu0 %v409
    %442 = vmatpush1.msra.mxu0 %v408
    %443 = vmatprep.subr.mxu0 %v406
    %444 = vmatpush1.msra.mxu0 %v405
    %445 = vmatprep.subr.mxu0 %v403
    %446 = vmatpush1.msra.mxu0 %v402
    %447 = vmatprep.subr.mxu0 %v400
    %448 = vmatpush1.msra.mxu0 %v399
    %449 = vmatprep.subr.mxu0 %v397
    %450 = vmatpush1.msra.mxu0 %v396
    %451 = vmatprep.subr.mxu0 %v394
    %452 = vmatpush1.msra.mxu0 %v393
    %453 = vmatprep.subr.mxu0 %v391
    %454 = vmatpush1.msra.mxu0 %v390
    %455 = vmatprep.subr.mxu0 %v388
    %456 = vmatpush1.msra.mxu0 %v387
    %457 = vmatprep.subr.mxu0 %v385
    %458 = vmatpush1.msra.mxu0 %v384
    %459 = vmatprep.subr.mxu0 %v382
    %460 = vmatpush1.msra.mxu0 %v381
    %461 = vmatprep.subr.mxu0 0.0
    %462 = vmatpush2.msra.mxu0 0.0
    %463 = vmatprep.subr.mxu0 0.0
    %464 = vmatpush2.msra.mxu0 0.0
    %465 = vmatprep.subr.mxu0 0.0
    %466 = vmatpush2.msra.mxu0 0.0
    %467 = vmatprep.subr.mxu0 0.0
    %468 = vmatpush2.msra.mxu0 0.0
    %469 = vmatprep.subr.mxu0 0.0
    %470 = vmatpush2.msra.mxu0 0.0
    %471 = vmatprep.subr.mxu0 0.0
    %472 = vmatpush2.msra.mxu0 0.0
    %473 = vmatprep.subr.mxu0 0.0
    %474 = vmatpush2.msra.mxu0 0.0
    %475 = vmatprep.subr.mxu0 0.0
    %476 = vmatpush2.msra.mxu0 0.0
    %477 = vmatprep.subr.mxu0 0.0
    %478 = vmatpush2.msra.mxu0 0.0
    %479 = vmatprep.subr.mxu0 0.0
    %480 = vmatpush2.msra.mxu0 0.0
    %481 = vmatprep.subr.mxu0 0.0
    %482 = vmatpush2.msra.mxu0 0.0
    %483 = vmatprep.subr.mxu0 0.0
    %484 = vmatpush2.msra.mxu0 0.0
    %485 = vmatprep.subr.mxu0 0.0
    %486 = vmatpush2.msra.mxu0 0.0
    %487 = vmatprep.subr.mxu0 0.0
    %488 = vmatpush2.msra.mxu0 0.0
    %489 = vmatprep.subr.mxu0 0.0
    %490 = vmatpush2.msra.mxu0 0.0
    %491 = vmatprep.subr.mxu0 0.0
    %492 = vmatpush2.msra.mxu0 0.0
    %493 = vmatprep.mubr.f32.mxu0 0.0
    %494 = vmatmul.mubr.f32.gmra.mxu0 0.0
    %v495 = vpop.f32.mrf.mxu0
    %v496 = vadd.f32 0.0, %v495
    %v497 = vpop.f32.mrf.mxu0
    %v498 = vadd.f32 0.0, %v497
    %499 = vdwg.mxu0
    %500 = vmatprep.subr.mxu0 0.0
    %501 = vmatpush1.msra.mxu0 %v428
    %502 = vmatprep.subr.mxu0 0.0
    %503 = vmatpush1.msra.mxu0 %v425
    %504 = vmatprep.subr.mxu0 0.0
    %505 = vmatpush1.msra.mxu0 %v422
    %506 = vmatprep.subr.mxu0 0.0
    %507 = vmatpush1.msra.mxu0 %v419
    %508 = vmatprep.subr.mxu0 0.0
    %509 = vmatpush1.msra.mxu0 %v416
    %510 = vmatprep.subr.mxu0 0.0
    %511 = vmatpush1.msra.mxu0 %v413
    %512 = vmatprep.subr.mxu0 0.0
    %513 = vmatpush1.msra.mxu0 %v410
    %514 = vmatprep.subr.mxu0 0.0
    %515 = vmatpush1.msra.mxu0 %v407
    %516 = vmatprep.subr.mxu0 0.0
    %517 = vmatpush1.msra.mxu0 %v404
    %518 = vmatprep.subr.mxu0 0.0
    %519 = vmatpush1.msra.mxu0 %v401
    %520 = vmatprep.subr.mxu0 0.0
    %521 = vmatpush1.msra.mxu0 %v398
    %522 = vmatprep.subr.mxu0 0.0
    %523 = vmatpush1.msra.mxu0 %v395
    %524 = vmatprep.subr.mxu0 0.0
    %525 = vmatpush1.msra.mxu0 %v392
    %526 = vmatprep.subr.mxu0 0.0
    %527 = vmatpush1.msra.mxu0 %v389
    %528 = vmatprep.subr.mxu0 0.0
    %529 = vmatpush1.msra.mxu0 %v386
    %530 = vmatprep.subr.mxu0 0.0
    %531 = vmatpush1.msra.mxu0 %v383
    %532 = vmatprep.subr.mxu0 0.0
    %533 = vmatpush2.msra.mxu0 0.0
    %534 = vmatprep.subr.mxu0 0.0
    %535 = vmatpush2.msra.mxu0 0.0
    %536 = vmatprep.subr.mxu0 0.0
    %537 = vmatpush2.msra.mxu0 0.0
    %538 = vmatprep.subr.mxu0 0.0
    %539 = vmatpush2.msra.mxu0 0.0
    %540 = vmatprep.subr.mxu0 0.0
    %541 = vmatpush2.msra.mxu0 0.0
    %542 = vmatprep.subr.mxu0 0.0
    %543 = vmatpush2.msra.mxu0 0.0
    %544 = vmatprep.subr.mxu0 0.0
    %545 = vmatpush2.msra.mxu0 0.0
    %546 = vmatprep.subr.mxu0 0.0
    %547 = vmatpush2.msra.mxu0 0.0
    %548 = vmatprep.subr.mxu0 0.0
    %549 = vmatpush2.msra.mxu0 0.0
    %550 = vmatprep.subr.mxu0 0.0
    %551 = vmatpush2.msra.mxu0 0.0
    %552 = vmatprep.subr.mxu0 0.0
    %553 = vmatpush2.msra.mxu0 0.0
    %554 = vmatprep.subr.mxu0 0.0
    %555 = vmatpush2.msra.mxu0 0.0
    %556 = vmatprep.subr.mxu0 0.0
    %557 = vmatpush2.msra.mxu0 0.0
    %558 = vmatprep.subr.mxu0 0.0
    %559 = vmatpush2.msra.mxu0 0.0
    %560 = vmatprep.subr.mxu0 0.0
    %561 = vmatpush2.msra.mxu0 0.0
    %562 = vmatprep.subr.mxu0 0.0
    %563 = vmatpush2.msra.mxu0 0.0
    %564 = vmatprep.mubr.f32.mxu0 0.0
    %565 = vmatmul.mubr.f32.gmra.mxu0 0.0
    %v566 = vpop.f32.mrf.mxu0
    %v567 = vadd.f32 0.0, %v566
    %v568 = vpop.f32.mrf.mxu0
    %569 = vdwg.mxu0
    %v570 = vadd.f32 %v378, %v496
    %v571 = vxor.u32 %v570, 2147483648
    %v572 = vmul.f32 %v571, 1.442695
    %v573 = vpow.pop %v572
    %v574 = vadd.f32 %v573, 1.0
    %v575 = vrcp.pop %v574
    %v576 = vmul.f32 1.0, %v575
    %v577 = vadd.f32 %v379, %v498
    %v578 = vxor.u32 %v577, 2147483648
    %v579 = vmul.f32 %v578, 1.442695
    %v580 = vpow.pop %v579
    %v581 = vadd.f32 %v580, 1.0
    %v582 = vrcp.pop %v581
    %v583 = vmul.f32 1.0, %v582
    %v584 = vadd.f32 %v567, %v376
    %v585 = vmul.f32 %v576, %v584
    %v586 = vadd.f32 %v380, %v585
    %v587 = vtanh.pop %v586
    %v588 = vsub.f32 1.0, %v583
    %v589 = vmul.f32 %v588, %v587
    %v590 = vmul.f32 %v583, 0.0
    %v591 = vadd.f32 %v589, %v590
    %v592 = vld [vmem:[#allocation2 + $0x18] sm:$0xff]
    %v593 = vld [vmem:[#allocation2 + $0x20] sm:$0xff]
    %v594 = vld [vmem:[#allocation2 + $0x28] sm:$0xff]
    %595 = vmatprep.subr.mxu0 %v427
    %596 = vmatpush1.msra.mxu0 %v426
    %597 = vmatprep.subr.mxu0 %v424
    %598 = vmatpush1.msra.mxu0 %v423
    %599 = vmatprep.subr.mxu0 %v421
    %600 = vmatpush1.msra.mxu0 %v420
    %601 = vmatprep.subr.mxu0 %v418
    %602 = vmatpush1.msra.mxu0 %v417
    %603 = vmatprep.subr.mxu0 %v415
    %604 = vmatpush1.msra.mxu0 %v414
    %605 = vmatprep.subr.mxu0 %v412
    %606 = vmatpush1.msra.mxu0 %v411
    %607 = vmatprep.subr.mxu0 %v409
    %608 = vmatpush1.msra.mxu0 %v408
    %609 = vmatprep.subr.mxu0 %v406
    %610 = vmatpush1.msra.mxu0 %v405
    %611 = vmatprep.subr.mxu0 %v403
    %612 = vmatpush1.msra.mxu0 %v402
    %613 = vmatprep.subr.mxu0 %v400
    %614 = vmatpush1.msra.mxu0 %v399
    %615 = vmatprep.subr.mxu0 %v397
    %616 = vmatpush1.msra.mxu0 %v396
    %617 = vmatprep.subr.mxu0 %v394
    %618 = vmatpush1.msra.mxu0 %v393
    %619 = vmatprep.subr.mxu0 %v391
    %620 = vmatpush1.msra.mxu0 %v390
    %621 = vmatprep.subr.mxu0 %v388
    %622 = vmatpush1.msra.mxu0 %v387
    %623 = vmatprep.subr.mxu0 %v385
    %624 = vmatpush1.msra.mxu0 %v384
    %625 = vmatprep.subr.mxu0 %v382
    %626 = vmatpush1.msra.mxu0 %v381
    %627 = vmatprep.subr.mxu0 0.0
    %628 = vmatpush2.msra.mxu0 0.0
    %629 = vmatprep.subr.mxu0 0.0
    %630 = vmatpush2.msra.mxu0 0.0
    %631 = vmatprep.subr.mxu0 0.0
    %632 = vmatpush2.msra.mxu0 0.0
    %633 = vmatprep.subr.mxu0 0.0
    %634 = vmatpush2.msra.mxu0 0.0
    %635 = vmatprep.subr.mxu0 0.0
    %636 = vmatpush2.msra.mxu0 0.0
    %637 = vmatprep.subr.mxu0 0.0
    %638 = vmatpush2.msra.mxu0 0.0
    %639 = vmatprep.subr.mxu0 0.0
    %640 = vmatpush2.msra.mxu0 0.0
    %641 = vmatprep.subr.mxu0 0.0
    %642 = vmatpush2.msra.mxu0 0.0
    %643 = vmatprep.subr.mxu0 0.0
    %644 = vmatpush2.msra.mxu0 0.0
    %645 = vmatprep.subr.mxu0 0.0
    %646 = vmatpush2.msra.mxu0 0.0
    %647 = vmatprep.subr.mxu0 0.0
    %648 = vmatpush2.msra.mxu0 0.0
    %649 = vmatprep.subr.mxu0 0.0
    %650 = vmatpush2.msra.mxu0 0.0
    %651 = vmatprep.subr.mxu0 0.0
    %652 = vmatpush2.msra.mxu0 0.0
    %653 = vmatprep.subr.mxu0 0.0
    %654 = vmatpush2.msra.mxu0 0.0
    %655 = vmatprep.subr.mxu0 0.0
    %656 = vmatpush2.msra.mxu0 0.0
    %657 = vmatprep.subr.mxu0 0.0
    %658 = vmatpush2.msra.mxu0 0.0
    %659 = vmatprep.mubr.f32.mxu0 0.0
    %660 = vmatmul.mubr.f32.gmra.mxu0 %v591
    %v661 = vpop.f32.mrf.mxu0
    %v662 = vadd.f32 0.0, %v661
    %v663 = vpop.f32.mrf.mxu0
    %v664 = vadd.f32 0.0, %v663
    %665 = vdwg.mxu0
    %666 = vmatprep.subr.mxu0 0.0
    %667 = vmatpush1.msra.mxu0 %v428
    %668 = vmatprep.subr.mxu0 0.0
    %669 = vmatpush1.msra.mxu0 %v425
    %670 = vmatprep.subr.mxu0 0.0
    %671 = vmatpush1.msra.mxu0 %v422
    %672 = vmatprep.subr.mxu0 0.0
    %673 = vmatpush1.msra.mxu0 %v419
    %674 = vmatprep.subr.mxu0 0.0
    %675 = vmatpush1.msra.mxu0 %v416
    %676 = vmatprep.subr.mxu0 0.0
    %677 = vmatpush1.msra.mxu0 %v413
    %678 = vmatprep.subr.mxu0 0.0
    %679 = vmatpush1.msra.mxu0 %v410
    %680 = vmatprep.subr.mxu0 0.0
    %681 = vmatpush1.msra.mxu0 %v407
    %682 = vmatprep.subr.mxu0 0.0
    %683 = vmatpush1.msra.mxu0 %v404
    %684 = vmatprep.subr.mxu0 0.0
    %685 = vmatpush1.msra.mxu0 %v401
    %686 = vmatprep.subr.mxu0 0.0
    %687 = vmatpush1.msra.mxu0 %v398
    %688 = vmatprep.subr.mxu0 0.0
    %689 = vmatpush1.msra.mxu0 %v395
    %690 = vmatprep.subr.mxu0 0.0
    %691 = vmatpush1.msra.mxu0 %v392
    %692 = vmatprep.subr.mxu0 0.0
    %693 = vmatpush1.msra.mxu0 %v389
    %694 = vmatprep.subr.mxu0 0.0
    %695 = vmatpush1.msra.mxu0 %v386
    %696 = vmatprep.subr.mxu0 0.0
    %697 = vmatpush1.msra.mxu0 %v383
    %698 = vmatprep.subr.mxu0 0.0
    %699 = vmatpush2.msra.mxu0 0.0
    %700 = vmatprep.subr.mxu0 0.0
    %701 = vmatpush2.msra.mxu0 0.0
    %702 = vmatprep.subr.mxu0 0.0
    %703 = vmatpush2.msra.mxu0 0.0
    %704 = vmatprep.subr.mxu0 0.0
    %705 = vmatpush2.msra.mxu0 0.0
    %706 = vmatprep.subr.mxu0 0.0
    %707 = vmatpush2.msra.mxu0 0.0
    %708 = vmatprep.subr.mxu0 0.0
    %709 = vmatpush2.msra.mxu0 0.0
    %710 = vmatprep.subr.mxu0 0.0
    %711 = vmatpush2.msra.mxu0 0.0
    %712 = vmatprep.subr.mxu0 0.0
    %713 = vmatpush2.msra.mxu0 0.0
    %714 = vmatprep.subr.mxu0 0.0
    %715 = vmatpush2.msra.mxu0 0.0
    %716 = vmatprep.subr.mxu0 0.0
    %717 = vmatpush2.msra.mxu0 0.0
    %718 = vmatprep.subr.mxu0 0.0
    %719 = vmatpush2.msra.mxu0 0.0
    %720 = vmatprep.subr.mxu0 0.0
    %721 = vmatpush2.msra.mxu0 0.0
    %722 = vmatprep.subr.mxu0 0.0
    %723 = vmatpush2.msra.mxu0 0.0
    %724 = vmatprep.subr.mxu0 0.0
    %725 = vmatpush2.msra.mxu0 0.0
    %726 = vmatprep.subr.mxu0 0.0
    %727 = vmatpush2.msra.mxu0 0.0
    %728 = vmatprep.subr.mxu0 0.0
    %729 = vmatpush2.msra.mxu0 0.0
    %730 = vmatprep.mubr.f32.mxu0 0.0
    %731 = vmatmul.mubr.f32.gmra.mxu0 %v591
    %v732 = vpop.f32.mrf.mxu0
    %v733 = vadd.f32 0.0, %v732
    %v734 = vpop.f32.mrf.mxu0
    %735 = vdwg.mxu0
    %v736 = vadd.f32 %v592, %v662
    %v737 = vxor.u32 %v736, 2147483648
    %v738 = vmul.f32 %v737, 1.442695
    %v739 = vpow.pop %v738
    %v740 = vadd.f32 %v739, 1.0
    %v741 = vrcp.pop %v740
    %v742 = vmul.f32 1.0, %v741
    %v743 = vadd.f32 %v593, %v664
    %v744 = vxor.u32 %v743, 2147483648
    %v745 = vmul.f32 %v744, 1.442695
    %v746 = vpow.pop %v745
    %v747 = vadd.f32 %v746, 1.0
    %v748 = vrcp.pop %v747
    %v749 = vmul.f32 1.0, %v748
    %v750 = vadd.f32 %v733, %v376
    %v751 = vmul.f32 %v742, %v750
    %v752 = vadd.f32 %v594, %v751
    %v753 = vtanh.pop %v752
    %v754 = vsub.f32 1.0, %v749
    %v755 = vmul.f32 %v754, %v753
    %v756 = vmul.f32 %v749, %v591
    %v757 = vadd.f32 %v755, %v756
    %v758 = vld [vmem:[#allocation2 + $0x30] sm:$0xff]
    %v759 = vld [vmem:[#allocation2 + $0x38] sm:$0xff]
    %v760 = vld [vmem:[#allocation2 + $0x40] sm:$0xff]
    %761 = vmatprep.subr.mxu0 %v427
    %762 = vmatpush1.msra.mxu0 %v426
    %763 = vmatprep.subr.mxu0 %v424
    %764 = vmatpush1.msra.mxu0 %v423
    %765 = vmatprep.subr.mxu0 %v421
    %766 = vmatpush1.msra.mxu0 %v420
    %767 = vmatprep.subr.mxu0 %v418
    %768 = vmatpush1.msra.mxu0 %v417
    %769 = vmatprep.subr.mxu0 %v415
    %770 = vmatpush1.msra.mxu0 %v414
    %771 = vmatprep.subr.mxu0 %v412
    %772 = vmatpush1.msra.mxu0 %v411
    %773 = vmatprep.subr.mxu0 %v409
    %774 = vmatpush1.msra.mxu0 %v408
    %775 = vmatprep.subr.mxu0 %v406
    %776 = vmatpush1.msra.mxu0 %v405
    %777 = vmatprep.subr.mxu0 %v403
    %778 = vmatpush1.msra.mxu0 %v402
    %779 = vmatprep.subr.mxu0 %v400
    %780 = vmatpush1.msra.mxu0 %v399
    %781 = vmatprep.subr.mxu0 %v397
    %782 = vmatpush1.msra.mxu0 %v396
    %783 = vmatprep.subr.mxu0 %v394
    %784 = vmatpush1.msra.mxu0 %v393
    %785 = vmatprep.subr.mxu0 %v391
    %786 = vmatpush1.msra.mxu0 %v390
    %787 = vmatprep.subr.mxu0 %v388
    %788 = vmatpush1.msra.mxu0 %v387
    %789 = vmatprep.subr.mxu0 %v385
    %790 = vmatpush1.msra.mxu0 %v384
    %791 = vmatprep.subr.mxu0 %v382
    %792 = vmatpush1.msra.mxu0 %v381
    %793 = vmatprep.subr.mxu0 0.0
    %794 = vmatpush2.msra.mxu0 0.0
    %795 = vmatprep.subr.mxu0 0.0
    %796 = vmatpush2.msra.mxu0 0.0
    %797 = vmatprep.subr.mxu0 0.0
    %798 = vmatpush2.msra.mxu0 0.0
    %799 = vmatprep.subr.mxu0 0.0
    %800 = vmatpush2.msra.mxu0 0.0
    %801 = vmatprep.subr.mxu0 0.0
    %802 = vmatpush2.msra.mxu0 0.0
    %803 = vmatprep.subr.mxu0 0.0
    %804 = vmatpush2.msra.mxu0 0.0
    %805 = vmatprep.subr.mxu0 0.0
    %806 = vmatpush2.msra.mxu0 0.0
    %807 = vmatprep.subr.mxu0 0.0
    %808 = vmatpush2.msra.mxu0 0.0
    %809 = vmatprep.subr.mxu0 0.0
    %810 = vmatpush2.msra.mxu0 0.0
    %811 = vmatprep.subr.mxu0 0.0
    %812 = vmatpush2.msra.mxu0 0.0
    %813 = vmatprep.subr.mxu0 0.0
    %814 = vmatpush2.msra.mxu0 0.0
    %815 = vmatprep.subr.mxu0 0.0
    %816 = vmatpush2.msra.mxu0 0.0
    %817 = vmatprep.subr.mxu0 0.0
    %818 = vmatpush2.msra.mxu0 0.0
    %819 = vmatprep.subr.mxu0 0.0
    %820 = vmatpush2.msra.mxu0 0.0
    %821 = vmatprep.subr.mxu0 0.0
    %822 = vmatpush2.msra.mxu0 0.0
    %823 = vmatprep.subr.mxu0 0.0
    %824 = vmatpush2.msra.mxu0 0.0
    %825 = vmatprep.mubr.f32.mxu0 0.0
    %826 = vmatmul.mubr.f32.gmra.mxu0 %v757
    %v827 = vpop.f32.mrf.mxu0
    %v828 = vadd.f32 0.0, %v827
    %v829 = vpop.f32.mrf.mxu0
    %v830 = vadd.f32 0.0, %v829
    %831 = vdwg.mxu0
    %832 = vmatprep.subr.mxu0 0.0
    %833 = vmatpush1.msra.mxu0 %v428
    %834 = vmatprep.subr.mxu0 0.0
    %835 = vmatpush1.msra.mxu0 %v425
    %836 = vmatprep.subr.mxu0 0.0
    %837 = vmatpush1.msra.mxu0 %v422
    %838 = vmatprep.subr.mxu0 0.0
    %839 = vmatpush1.msra.mxu0 %v419
    %840 = vmatprep.subr.mxu0 0.0
    %841 = vmatpush1.msra.mxu0 %v416
    %842 = vmatprep.subr.mxu0 0.0
    %843 = vmatpush1.msra.mxu0 %v413
    %844 = vmatprep.subr.mxu0 0.0
    %845 = vmatpush1.msra.mxu0 %v410
    %846 = vmatprep.subr.mxu0 0.0
    %847 = vmatpush1.msra.mxu0 %v407
    %848 = vmatprep.subr.mxu0 0.0
    %849 = vmatpush1.msra.mxu0 %v404
    %850 = vmatprep.subr.mxu0 0.0
    %851 = vmatpush1.msra.mxu0 %v401
    %852 = vmatprep.subr.mxu0 0.0
    %853 = vmatpush1.msra.mxu0 %v398
    %854 = vmatprep.subr.mxu0 0.0
    %855 = vmatpush1.msra.mxu0 %v395
    %856 = vmatprep.subr.mxu0 0.0
    %857 = vmatpush1.msra.mxu0 %v392
    %858 = vmatprep.subr.mxu0 0.0
    %859 = vmatpush1.msra.mxu0 %v389
    %860 = vmatprep.subr.mxu0 0.0
    %861 = vmatpush1.msra.mxu0 %v386
    %862 = vmatprep.subr.mxu0 0.0
    %863 = vmatpush1.msra.mxu0 %v383
    %864 = vmatprep.subr.mxu0 0.0
    %865 = vmatpush2.msra.mxu0 0.0
    %866 = vmatprep.subr.mxu0 0.0
    %867 = vmatpush2.msra.mxu0 0.0
    %868 = vmatprep.subr.mxu0 0.0
    %869 = vmatpush2.msra.mxu0 0.0
    %870 = vmatprep.subr.mxu0 0.0
    %871 = vmatpush2.msra.mxu0 0.0
    %872 = vmatprep.subr.mxu0 0.0
    %873 = vmatpush2.msra.mxu0 0.0
    %874 = vmatprep.subr.mxu0 0.0
    %875 = vmatpush2.msra.mxu0 0.0
    %876 = vmatprep.subr.mxu0 0.0
    %877 = vmatpush2.msra.mxu0 0.0
    %878 = vmatprep.subr.mxu0 0.0
    %879 = vmatpush2.msra.mxu0 0.0
    %880 = vmatprep.subr.mxu0 0.0
    %881 = vmatpush2.msra.mxu0 0.0
    %882 = vmatprep.subr.mxu0 0.0
    %883 = vmatpush2.msra.mxu0 0.0
    %884 = vmatprep.subr.mxu0 0.0
    %885 = vmatpush2.msra.mxu0 0.0
    %886 = vmatprep.subr.mxu0 0.0
    %887 = vmatpush2.msra.mxu0 0.0
    %888 = vmatprep.subr.mxu0 0.0
    %889 = vmatpush2.msra.mxu0 0.0
    %890 = vmatprep.subr.mxu0 0.0
    %891 = vmatpush2.msra.mxu0 0.0
    %892 = vmatprep.subr.mxu0 0.0
    %893 = vmatpush2.msra.mxu0 0.0
    %894 = vmatprep.subr.mxu0 0.0
    %895 = vmatpush2.msra.mxu0 0.0
    %896 = vmatprep.mubr.f32.mxu0 0.0
    %897 = vmatmul.mubr.f32.gmra.mxu0 %v757
    %v898 = vpop.f32.mrf.mxu0
    %v899 = vadd.f32 0.0, %v898
    %v900 = vpop.f32.mrf.mxu0
    %901 = vdwg.mxu0
    %v902 = vadd.f32 %v758, %v828
    %v903 = vxor.u32 %v902, 2147483648
    %v904 = vmul.f32 %v903, 1.442695
    %v905 = vpow.pop %v904
    %v906 = vadd.f32 %v905, 1.0
    %v907 = vrcp.pop %v906
    %v908 = vmul.f32 1.0, %v907
    %v909 = vadd.f32 %v759, %v830
    %v910 = vxor.u32 %v909, 2147483648
    %v911 = vmul.f32 %v910, 1.442695
    %v912 = vpow.pop %v911
    %v913 = vadd.f32 %v912, 1.0
    %v914 = vrcp.pop %v913
    %v915 = vmul.f32 1.0, %v914
    %v916 = vadd.f32 %v899, %v376
    %v917 = vmul.f32 %v908, %v916
    %v918 = vadd.f32 %v760, %v917
    %v919 = vtanh.pop %v918
    %v920 = vsub.f32 1.0, %v915
    %v921 = vmul.f32 %v920, %v919
    %v922 = vmul.f32 %v915, %v757
    %v923 = vadd.f32 %v921, %v922
    %v924 = vld [vmem:[#allocation2 + $0x48] sm:$0xff]
    %v925 = vld [vmem:[#allocation2 + $0x50] sm:$0xff]
    %v926 = vld [vmem:[#allocation2 + $0x58] sm:$0xff]
    %927 = vmatprep.subr.mxu0 %v427
    %928 = vmatpush1.msra.mxu0 %v426
    %929 = vmatprep.subr.mxu0 %v424
    %930 = vmatpush1.msra.mxu0 %v423
    %931 = vmatprep.subr.mxu0 %v421
    %932 = vmatpush1.msra.mxu0 %v420
    %933 = vmatprep.subr.mxu0 %v418
    %934 = vmatpush1.msra.mxu0 %v417
    %935 = vmatprep.subr.mxu0 %v415
    %936 = vmatpush1.msra.mxu0 %v414
    %937 = vmatprep.subr.mxu0 %v412
    %938 = vmatpush1.msra.mxu0 %v411
    %939 = vmatprep.subr.mxu0 %v409
    %940 = vmatpush1.msra.mxu0 %v408
    %941 = vmatprep.subr.mxu0 %v406
    %942 = vmatpush1.msra.mxu0 %v405
    %943 = vmatprep.subr.mxu0 %v403
    %944 = vmatpush1.msra.mxu0 %v402
    %945 = vmatprep.subr.mxu0 %v400
    %946 = vmatpush1.msra.mxu0 %v399
    %947 = vmatprep.subr.mxu0 %v397
    %948 = vmatpush1.msra.mxu0 %v396
    %949 = vmatprep.subr.mxu0 %v394
    %950 = vmatpush1.msra.mxu0 %v393
    %951 = vmatprep.subr.mxu0 %v391
    %952 = vmatpush1.msra.mxu0 %v390
    %953 = vmatprep.subr.mxu0 %v388
    %954 = vmatpush1.msra.mxu0 %v387
    %955 = vmatprep.subr.mxu0 %v385
    %956 = vmatpush1.msra.mxu0 %v384
    %957 = vmatprep.subr.mxu0 %v382
    %958 = vmatpush1.msra.mxu0 %v381
    %959 = vmatprep.subr.mxu0 0.0
    %960 = vmatpush2.msra.mxu0 0.0
    %961 = vmatprep.subr.mxu0 0.0
    %962 = vmatpush2.msra.mxu0 0.0
    %963 = vmatprep.subr.mxu0 0.0
    %964 = vmatpush2.msra.mxu0 0.0
    %965 = vmatprep.subr.mxu0 0.0
    %966 = vmatpush2.msra.mxu0 0.0
    %967 = vmatprep.subr.mxu0 0.0
    %968 = vmatpush2.msra.mxu0 0.0
    %969 = vmatprep.subr.mxu0 0.0
    %970 = vmatpush2.msra.mxu0 0.0
    %971 = vmatprep.subr.mxu0 0.0
    %972 = vmatpush2.msra.mxu0 0.0
    %973 = vmatprep.subr.mxu0 0.0
    %974 = vmatpush2.msra.mxu0 0.0
    %975 = vmatprep.subr.mxu0 0.0
    %976 = vmatpush2.msra.mxu0 0.0
    %977 = vmatprep.subr.mxu0 0.0
    %978 = vmatpush2.msra.mxu0 0.0
    %979 = vmatprep.subr.mxu0 0.0
    %980 = vmatpush2.msra.mxu0 0.0
    %981 = vmatprep.subr.mxu0 0.0
    %982 = vmatpush2.msra.mxu0 0.0
    %983 = vmatprep.subr.mxu0 0.0
    %984 = vmatpush2.msra.mxu0 0.0
    %985 = vmatprep.subr.mxu0 0.0
    %986 = vmatpush2.msra.mxu0 0.0
    %987 = vmatprep.subr.mxu0 0.0
    %988 = vmatpush2.msra.mxu0 0.0
    %989 = vmatprep.subr.mxu0 0.0
    %990 = vmatpush2.msra.mxu0 0.0
    %991 = vmatprep.mubr.f32.mxu0 0.0
    %992 = vmatmul.mubr.f32.gmra.mxu0 %v923
    %v993 = vpop.f32.mrf.mxu0
    %v994 = vadd.f32 0.0, %v993
    %v995 = vpop.f32.mrf.mxu0
    %v996 = vadd.f32 0.0, %v995
    %997 = vdwg.mxu0
    %998 = vmatprep.subr.mxu0 0.0
    %999 = vmatpush1.msra.mxu0 %v428
    %1000 = vmatprep.subr.mxu0 0.0
    %1001 = vmatpush1.msra.mxu0 %v425
    %1002 = vmatprep.subr.mxu0 0.0
    %1003 = vmatpush1.msra.mxu0 %v422
    %1004 = vmatprep.subr.mxu0 0.0
    %1005 = vmatpush1.msra.mxu0 %v419
    %1006 = vmatprep.subr.mxu0 0.0
    %1007 = vmatpush1.msra.mxu0 %v416
    %1008 = vmatprep.subr.mxu0 0.0
    %1009 = vmatpush1.msra.mxu0 %v413
    %1010 = vmatprep.subr.mxu0 0.0
    %1011 = vmatpush1.msra.mxu0 %v410
    %1012 = vmatprep.subr.mxu0 0.0
    %1013 = vmatpush1.msra.mxu0 %v407
    %1014 = vmatprep.subr.mxu0 0.0
    %1015 = vmatpush1.msra.mxu0 %v404
    %1016 = vmatprep.subr.mxu0 0.0
    %1017 = vmatpush1.msra.mxu0 %v401
    %1018 = vmatprep.subr.mxu0 0.0
    %1019 = vmatpush1.msra.mxu0 %v398
    %1020 = vmatprep.subr.mxu0 0.0
    %1021 = vmatpush1.msra.mxu0 %v395
    %1022 = vmatprep.subr.mxu0 0.0
    %1023 = vmatpush1.msra.mxu0 %v392
    %1024 = vmatprep.subr.mxu0 0.0
    %1025 = vmatpush1.msra.mxu0 %v389
    %1026 = vmatprep.subr.mxu0 0.0
    %1027 = vmatpush1.msra.mxu0 %v386
    %1028 = vmatprep.subr.mxu0 0.0
    %1029 = vmatpush1.msra.mxu0 %v383
    %1030 = vmatprep.subr.mxu0 0.0
    %1031 = vmatpush2.msra.mxu0 0.0
    %1032 = vmatprep.subr.mxu0 0.0
    %1033 = vmatpush2.msra.mxu0 0.0
    %1034 = vmatprep.subr.mxu0 0.0
    %1035 = vmatpush2.msra.mxu0 0.0
    %1036 = vmatprep.subr.mxu0 0.0
    %1037 = vmatpush2.msra.mxu0 0.0
    %1038 = vmatprep.subr.mxu0 0.0
    %1039 = vmatpush2.msra.mxu0 0.0
    %1040 = vmatprep.subr.mxu0 0.0
    %1041 = vmatpush2.msra.mxu0 0.0
    %1042 = vmatprep.subr.mxu0 0.0
    %1043 = vmatpush2.msra.mxu0 0.0
    %1044 = vmatprep.subr.mxu0 0.0
    %1045 = vmatpush2.msra.mxu0 0.0
    %1046 = vmatprep.subr.mxu0 0.0
    %1047 = vmatpush2.msra.mxu0 0.0
    %1048 = vmatprep.subr.mxu0 0.0
    %1049 = vmatpush2.msra.mxu0 0.0
    %1050 = vmatprep.subr.mxu0 0.0
    %1051 = vmatpush2.msra.mxu0 0.0
    %1052 = vmatprep.subr.mxu0 0.0
    %1053 = vmatpush2.msra.mxu0 0.0
    %1054 = vmatprep.subr.mxu0 0.0
    %1055 = vmatpush2.msra.mxu0 0.0
    %1056 = vmatprep.subr.mxu0 0.0
    %1057 = vmatpush2.msra.mxu0 0.0
    %1058 = vmatprep.subr.mxu0 0.0
    %1059 = vmatpush2.msra.mxu0 0.0
    %1060 = vmatprep.subr.mxu0 0.0
    %1061 = vmatpush2.msra.mxu0 0.0
    %1062 = vmatprep.mubr.f32.mxu0 0.0
    %1063 = vmatmul.mubr.f32.gmra.mxu0 %v923
    %v1064 = vpop.f32.mrf.mxu0
    %v1065 = vadd.f32 0.0, %v1064
    %v1066 = vpop.f32.mrf.mxu0
    %1067 = vdwg.mxu0
    %v1068 = vadd.f32 %v924, %v994
    %v1069 = vxor.u32 %v1068, 2147483648
    %v1070 = vmul.f32 %v1069, 1.442695
    %v1071 = vpow.pop %v1070
    %v1072 = vadd.f32 %v1071, 1.0
    %v1073 = vrcp.pop %v1072
    %v1074 = vmul.f32 1.0, %v1073
    %v1075 = vadd.f32 %v925, %v996
    %v1076 = vxor.u32 %v1075, 2147483648
    %v1077 = vmul.f32 %v1076, 1.442695
    %v1078 = vpow.pop %v1077
    %v1079 = vadd.f32 %v1078, 1.0
    %v1080 = vrcp.pop %v1079
    %v1081 = vmul.f32 1.0, %v1080
    %v1082 = vadd.f32 %v1065, %v376
    %v1083 = vmul.f32 %v1074, %v1082
    %v1084 = vadd.f32 %v926, %v1083
    %v1085 = vtanh.pop %v1084
    %v1086 = vsub.f32 1.0, %v1081
    %v1087 = vmul.f32 %v1086, %v1085
    %v1088 = vmul.f32 %v1081, %v923
    %v1089 = vadd.f32 %v1087, %v1088
    %v1090 = vld [vmem:[#allocation2 + $0x60] sm:$0xff]
    %v1091 = vld [vmem:[#allocation2 + $0x68] sm:$0xff]
    %v1092 = vld [vmem:[#allocation2 + $0x70] sm:$0xff]
    %1093 = vmatprep.subr.mxu0 %v427
    %1094 = vmatpush1.msra.mxu0 %v426
    %1095 = vmatprep.subr.mxu0 %v424
    %1096 = vmatpush1.msra.mxu0 %v423
    %1097 = vmatprep.subr.mxu0 %v421
    %1098 = vmatpush1.msra.mxu0 %v420
    %1099 = vmatprep.subr.mxu0 %v418
    %1100 = vmatpush1.msra.mxu0 %v417
    %1101 = vmatprep.subr.mxu0 %v415
    %1102 = vmatpush1.msra.mxu0 %v414
    %1103 = vmatprep.subr.mxu0 %v412
    %1104 = vmatpush1.msra.mxu0 %v411
    %1105 = vmatprep.subr.mxu0 %v409
    %1106 = vmatpush1.msra.mxu0 %v408
    %1107 = vmatprep.subr.mxu0 %v406
    %1108 = vmatpush1.msra.mxu0 %v405
    %1109 = vmatprep.subr.mxu0 %v403
    %1110 = vmatpush1.msra.mxu0 %v402
    %1111 = vmatprep.subr.mxu0 %v400
    %1112 = vmatpush1.msra.mxu0 %v399
    %1113 = vmatprep.subr.mxu0 %v397
    %1114 = vmatpush1.msra.mxu0 %v396
    %1115 = vmatprep.subr.mxu0 %v394
    %1116 = vmatpush1.msra.mxu0 %v393
    %1117 = vmatprep.subr.mxu0 %v391
    %1118 = vmatpush1.msra.mxu0 %v390
    %1119 = vmatprep.subr.mxu0 %v388
    %1120 = vmatpush1.msra.mxu0 %v387
    %1121 = vmatprep.subr.mxu0 %v385
    %1122 = vmatpush1.msra.mxu0 %v384
    %1123 = vmatprep.subr.mxu0 %v382
    %1124 = vmatpush1.msra.mxu0 %v381
    %1125 = vmatprep.subr.mxu0 0.0
    %1126 = vmatpush2.msra.mxu0 0.0
    %1127 = vmatprep.subr.mxu0 0.0
    %1128 = vmatpush2.msra.mxu0 0.0
    %1129 = vmatprep.subr.mxu0 0.0
    %1130 = vmatpush2.msra.mxu0 0.0
    %1131 = vmatprep.subr.mxu0 0.0
    %1132 = vmatpush2.msra.mxu0 0.0
    %1133 = vmatprep.subr.mxu0 0.0
    %1134 = vmatpush2.msra.mxu0 0.0
    %1135 = vmatprep.subr.mxu0 0.0
    %1136 = vmatpush2.msra.mxu0 0.0
    %1137 = vmatprep.subr.mxu0 0.0
    %1138 = vmatpush2.msra.mxu0 0.0
    %1139 = vmatprep.subr.mxu0 0.0
    %1140 = vmatpush2.msra.mxu0 0.0
    %1141 = vmatprep.subr.mxu0 0.0
    %1142 = vmatpush2.msra.mxu0 0.0
    %1143 = vmatprep.subr.mxu0 0.0
    %1144 = vmatpush2.msra.mxu0 0.0
    %1145 = vmatprep.subr.mxu0 0.0
    %1146 = vmatpush2.msra.mxu0 0.0
    %1147 = vmatprep.subr.mxu0 0.0
    %1148 = vmatpush2.msra.mxu0 0.0
    %1149 = vmatprep.subr.mxu0 0.0
    %1150 = vmatpush2.msra.mxu0 0.0
    %1151 = vmatprep.subr.mxu0 0.0
    %1152 = vmatpush2.msra.mxu0 0.0
    %1153 = vmatprep.subr.mxu0 0.0
    %1154 = vmatpush2.msra.mxu0 0.0
    %1155 = vmatprep.subr.mxu0 0.0
    %1156 = vmatpush2.msra.mxu0 0.0
    %1157 = vmatprep.mubr.f32.mxu0 0.0
    %1158 = vmatmul.mubr.f32.gmra.mxu0 %v1089
    %v1159 = vpop.f32.mrf.mxu0
    %v1160 = vadd.f32 0.0, %v1159
    %v1161 = vpop.f32.mrf.mxu0
    %v1162 = vadd.f32 0.0, %v1161
    %1163 = vdwg.mxu0
    %1164 = vmatprep.subr.mxu0 0.0
    %1165 = vmatpush1.msra.mxu0 %v428
    %1166 = vmatprep.subr.mxu0 0.0
    %1167 = vmatpush1.msra.mxu0 %v425
    %1168 = vmatprep.subr.mxu0 0.0
    %1169 = vmatpush1.msra.mxu0 %v422
    %1170 = vmatprep.subr.mxu0 0.0
    %1171 = vmatpush1.msra.mxu0 %v419
    %1172 = vmatprep.subr.mxu0 0.0
    %1173 = vmatpush1.msra.mxu0 %v416
    %1174 = vmatprep.subr.mxu0 0.0
    %1175 = vmatpush1.msra.mxu0 %v413
    %1176 = vmatprep.subr.mxu0 0.0
    %1177 = vmatpush1.msra.mxu0 %v410
    %1178 = vmatprep.subr.mxu0 0.0
    %1179 = vmatpush1.msra.mxu0 %v407
    %1180 = vmatprep.subr.mxu0 0.0
    %1181 = vmatpush1.msra.mxu0 %v404
    %1182 = vmatprep.subr.mxu0 0.0
    %1183 = vmatpush1.msra.mxu0 %v401
    %1184 = vmatprep.subr.mxu0 0.0
    %1185 = vmatpush1.msra.mxu0 %v398
    %1186 = vmatprep.subr.mxu0 0.0
    %1187 = vmatpush1.msra.mxu0 %v395
    %1188 = vmatprep.subr.mxu0 0.0
    %1189 = vmatpush1.msra.mxu0 %v392
    %1190 = vmatprep.subr.mxu0 0.0
    %1191 = vmatpush1.msra.mxu0 %v389
    %1192 = vmatprep.subr.mxu0 0.0
    %1193 = vmatpush1.msra.mxu0 %v386
    %1194 = vmatprep.subr.mxu0 0.0
    %1195 = vmatpush1.msra.mxu0 %v383
    %1196 = vmatprep.subr.mxu0 0.0
    %1197 = vmatpush2.msra.mxu0 0.0
    %1198 = vmatprep.subr.mxu0 0.0
    %1199 = vmatpush2.msra.mxu0 0.0
    %1200 = vmatprep.subr.mxu0 0.0
    %1201 = vmatpush2.msra.mxu0 0.0
    %1202 = vmatprep.subr.mxu0 0.0
    %1203 = vmatpush2.msra.mxu0 0.0
    %1204 = vmatprep.subr.mxu0 0.0
    %1205 = vmatpush2.msra.mxu0 0.0
    %1206 = vmatprep.subr.mxu0 0.0
    %1207 = vmatpush2.msra.mxu0 0.0
    %1208 = vmatprep.subr.mxu0 0.0
    %1209 = vmatpush2.msra.mxu0 0.0
    %1210 = vmatprep.subr.mxu0 0.0
    %1211 = vmatpush2.msra.mxu0 0.0
    %1212 = vmatprep.subr.mxu0 0.0
    %1213 = vmatpush2.msra.mxu0 0.0
    %1214 = vmatprep.subr.mxu0 0.0
    %1215 = vmatpush2.msra.mxu0 0.0
    %1216 = vmatprep.subr.mxu0 0.0
    %1217 = vmatpush2.msra.mxu0 0.0
    %1218 = vmatprep.subr.mxu0 0.0
    %1219 = vmatpush2.msra.mxu0 0.0
    %1220 = vmatprep.subr.mxu0 0.0
    %1221 = vmatpush2.msra.mxu0 0.0
    %1222 = vmatprep.subr.mxu0 0.0
    %1223 = vmatpush2.msra.mxu0 0.0
    %1224 = vmatprep.subr.mxu0 0.0
    %1225 = vmatpush2.msra.mxu0 0.0
    %1226 = vmatprep.subr.mxu0 0.0
    %1227 = vmatpush2.msra.mxu0 0.0
    %1228 = vmatprep.mubr.f32.mxu0 0.0
    %1229 = vmatmul.mubr.f32.gmra.mxu0 %v1089
    %v1230 = vpop.f32.mrf.mxu0
    %v1231 = vadd.f32 0.0, %v1230
    %v1232 = vpop.f32.mrf.mxu0
    %1233 = vdwg.mxu0
    %v1234 = vadd.f32 %v1090, %v1160
    %v1235 = vxor.u32 %v1234, 2147483648
    %v1236 = vmul.f32 %v1235, 1.442695
    %v1237 = vpow.pop %v1236
    %v1238 = vadd.f32 %v1237, 1.0
    %v1239 = vrcp.pop %v1238
    %v1240 = vmul.f32 1.0, %v1239
    %v1241 = vadd.f32 %v1091, %v1162
    %v1242 = vxor.u32 %v1241, 2147483648
    %v1243 = vmul.f32 %v1242, 1.442695
    %v1244 = vpow.pop %v1243
    %v1245 = vadd.f32 %v1244, 1.0
    %v1246 = vrcp.pop %v1245
    %v1247 = vmul.f32 1.0, %v1246
    %v1248 = vadd.f32 %v1231, %v376
    %v1249 = vmul.f32 %v1240, %v1248
    %v1250 = vadd.f32 %v1092, %v1249
    %v1251 = vtanh.pop %v1250
    %v1252 = vsub.f32 1.0, %v1247
    %v1253 = vmul.f32 %v1252, %v1251
    %v1254 = vmul.f32 %v1247, %v1089
    %v1255 = vadd.f32 %v1253, %v1254
    %v1256 = vld [vmem:[#allocation2 + $0x78] sm:$0xff]
    %v1257 = vld [vmem:[#allocation2 + $0x80] sm:$0xff]
    %v1258 = vld [vmem:[#allocation2 + $0x88] sm:$0xff]
    %1259 = vmatprep.subr.mxu0 %v427
    %1260 = vmatpush1.msra.mxu0 %v426
    %1261 = vmatprep.subr.mxu0 %v424
    %1262 = vmatpush1.msra.mxu0 %v423
    %1263 = vmatprep.subr.mxu0 %v421
    %1264 = vmatpush1.msra.mxu0 %v420
    %1265 = vmatprep.subr.mxu0 %v418
    %1266 = vmatpush1.msra.mxu0 %v417
    %1267 = vmatprep.subr.mxu0 %v415
    %1268 = vmatpush1.msra.mxu0 %v414
    %1269 = vmatprep.subr.mxu0 %v412
    %1270 = vmatpush1.msra.mxu0 %v411
    %1271 = vmatprep.subr.mxu0 %v409
    %1272 = vmatpush1.msra.mxu0 %v408
    %1273 = vmatprep.subr.mxu0 %v406
    %1274 = vmatpush1.msra.mxu0 %v405
    %1275 = vmatprep.subr.mxu0 %v403
    %1276 = vmatpush1.msra.mxu0 %v402
    %1277 = vmatprep.subr.mxu0 %v400
    %1278 = vmatpush1.msra.mxu0 %v399
    %1279 = vmatprep.subr.mxu0 %v397
    %1280 = vmatpush1.msra.mxu0 %v396
    %1281 = vmatprep.subr.mxu0 %v394
    %1282 = vmatpush1.msra.mxu0 %v393
    %1283 = vmatprep.subr.mxu0 %v391
    %1284 = vmatpush1.msra.mxu0 %v390
    %1285 = vmatprep.subr.mxu0 %v388
    %1286 = vmatpush1.msra.mxu0 %v387
    %1287 = vmatprep.subr.mxu0 %v385
    %1288 = vmatpush1.msra.mxu0 %v384
    %1289 = vmatprep.subr.mxu0 %v382
    %1290 = vmatpush1.msra.mxu0 %v381
    %1291 = vmatprep.subr.mxu0 0.0
    %1292 = vmatpush2.msra.mxu0 0.0
    %1293 = vmatprep.subr.mxu0 0.0
    %1294 = vmatpush2.msra.mxu0 0.0
    %1295 = vmatprep.subr.mxu0 0.0
    %1296 = vmatpush2.msra.mxu0 0.0
    %1297 = vmatprep.subr.mxu0 0.0
    %1298 = vmatpush2.msra.mxu0 0.0
    %1299 = vmatprep.subr.mxu0 0.0
    %1300 = vmatpush2.msra.mxu0 0.0
    %1301 = vmatprep.subr.mxu0 0.0
    %1302 = vmatpush2.msra.mxu0 0.0
    %1303 = vmatprep.subr.mxu0 0.0
    %1304 = vmatpush2.msra.mxu0 0.0
    %1305 = vmatprep.subr.mxu0 0.0
    %1306 = vmatpush2.msra.mxu0 0.0
    %1307 = vmatprep.subr.mxu0 0.0
    %1308 = vmatpush2.msra.mxu0 0.0
    %1309 = vmatprep.subr.mxu0 0.0
    %1310 = vmatpush2.msra.mxu0 0.0
    %1311 = vmatprep.subr.mxu0 0.0
    %1312 = vmatpush2.msra.mxu0 0.0
    %1313 = vmatprep.subr.mxu0 0.0
    %1314 = vmatpush2.msra.mxu0 0.0
    %1315 = vmatprep.subr.mxu0 0.0
    %1316 = vmatpush2.msra.mxu0 0.0
    %1317 = vmatprep.subr.mxu0 0.0
    %1318 = vmatpush2.msra.mxu0 0.0
    %1319 = vmatprep.subr.mxu0 0.0
    %1320 = vmatpush2.msra.mxu0 0.0
    %1321 = vmatprep.subr.mxu0 0.0
    %1322 = vmatpush2.msra.mxu0 0.0
    %1323 = vmatprep.mubr.f32.mxu0 0.0
    %1324 = vmatmul.mubr.f32.gmra.mxu0 %v1255
    %v1325 = vpop.f32.mrf.mxu0
    %v1326 = vadd.f32 0.0, %v1325
    %v1327 = vpop.f32.mrf.mxu0
    %v1328 = vadd.f32 0.0, %v1327
    %1329 = vdwg.mxu0
    %1330 = vmatprep.subr.mxu0 0.0
    %1331 = vmatpush1.msra.mxu0 %v428
    %1332 = vmatprep.subr.mxu0 0.0
    %1333 = vmatpush1.msra.mxu0 %v425
    %1334 = vmatprep.subr.mxu0 0.0
    %1335 = vmatpush1.msra.mxu0 %v422
    %1336 = vmatprep.subr.mxu0 0.0
    %1337 = vmatpush1.msra.mxu0 %v419
    %1338 = vmatprep.subr.mxu0 0.0
    %1339 = vmatpush1.msra.mxu0 %v416
    %1340 = vmatprep.subr.mxu0 0.0
    %1341 = vmatpush1.msra.mxu0 %v413
    %1342 = vmatprep.subr.mxu0 0.0
    %1343 = vmatpush1.msra.mxu0 %v410
    %1344 = vmatprep.subr.mxu0 0.0
    %1345 = vmatpush1.msra.mxu0 %v407
    %1346 = vmatprep.subr.mxu0 0.0
    %1347 = vmatpush1.msra.mxu0 %v404
    %1348 = vmatprep.subr.mxu0 0.0
    %1349 = vmatpush1.msra.mxu0 %v401
    %1350 = vmatprep.subr.mxu0 0.0
    %1351 = vmatpush1.msra.mxu0 %v398
    %1352 = vmatprep.subr.mxu0 0.0
    %1353 = vmatpush1.msra.mxu0 %v395
    %1354 = vmatprep.subr.mxu0 0.0
    %1355 = vmatpush1.msra.mxu0 %v392
    %1356 = vmatprep.subr.mxu0 0.0
    %1357 = vmatpush1.msra.mxu0 %v389
    %1358 = vmatprep.subr.mxu0 0.0
    %1359 = vmatpush1.msra.mxu0 %v386
    %1360 = vmatprep.subr.mxu0 0.0
    %1361 = vmatpush1.msra.mxu0 %v383
    %1362 = vmatprep.subr.mxu0 0.0
    %1363 = vmatpush2.msra.mxu0 0.0
    %1364 = vmatprep.subr.mxu0 0.0
    %1365 = vmatpush2.msra.mxu0 0.0
    %1366 = vmatprep.subr.mxu0 0.0
    %1367 = vmatpush2.msra.mxu0 0.0
    %1368 = vmatprep.subr.mxu0 0.0
    %1369 = vmatpush2.msra.mxu0 0.0
    %1370 = vmatprep.subr.mxu0 0.0
    %1371 = vmatpush2.msra.mxu0 0.0
    %1372 = vmatprep.subr.mxu0 0.0
    %1373 = vmatpush2.msra.mxu0 0.0
    %1374 = vmatprep.subr.mxu0 0.0
    %1375 = vmatpush2.msra.mxu0 0.0
    %1376 = vmatprep.subr.mxu0 0.0
    %1377 = vmatpush2.msra.mxu0 0.0
    %1378 = vmatprep.subr.mxu0 0.0
    %1379 = vmatpush2.msra.mxu0 0.0
    %1380 = vmatprep.subr.mxu0 0.0
    %1381 = vmatpush2.msra.mxu0 0.0
    %1382 = vmatprep.subr.mxu0 0.0
    %1383 = vmatpush2.msra.mxu0 0.0
    %1384 = vmatprep.subr.mxu0 0.0
    %1385 = vmatpush2.msra.mxu0 0.0
    %1386 = vmatprep.subr.mxu0 0.0
    %1387 = vmatpush2.msra.mxu0 0.0
    %1388 = vmatprep.subr.mxu0 0.0
    %1389 = vmatpush2.msra.mxu0 0.0
    %1390 = vmatprep.subr.mxu0 0.0
    %1391 = vmatpush2.msra.mxu0 0.0
    %1392 = vmatprep.subr.mxu0 0.0
    %1393 = vmatpush2.msra.mxu0 0.0
    %1394 = vmatprep.mubr.f32.mxu0 0.0
    %1395 = vmatmul.mubr.f32.gmra.mxu0 %v1255
    %v1396 = vpop.f32.mrf.mxu0
    %v1397 = vadd.f32 0.0, %v1396
    %v1398 = vpop.f32.mrf.mxu0
    %1399 = vdwg.mxu0
    %v1400 = vadd.f32 %v1256, %v1326
    %v1401 = vxor.u32 %v1400, 2147483648
    %v1402 = vmul.f32 %v1401, 1.442695
    %v1403 = vpow.pop %v1402
    %v1404 = vadd.f32 %v1403, 1.0
    %v1405 = vrcp.pop %v1404
    %v1406 = vmul.f32 1.0, %v1405
    %v1407 = vadd.f32 %v1257, %v1328
    %v1408 = vxor.u32 %v1407, 2147483648
    %v1409 = vmul.f32 %v1408, 1.442695
    %v1410 = vpow.pop %v1409
    %v1411 = vadd.f32 %v1410, 1.0
    %v1412 = vrcp.pop %v1411
    %v1413 = vmul.f32 1.0, %v1412
    %v1414 = vadd.f32 %v1397, %v376
    %v1415 = vmul.f32 %v1406, %v1414
    %v1416 = vadd.f32 %v1258, %v1415
    %v1417 = vtanh.pop %v1416
    %v1418 = vsub.f32 1.0, %v1413
    %v1419 = vmul.f32 %v1418, %v1417
    %v1420 = vmul.f32 %v1413, %v1255
    %v1421 = vadd.f32 %v1419, %v1420
    %v1422 = vld [vmem:[#allocation2 + $0x90] sm:$0xff]
    %v1423 = vld [vmem:[#allocation2 + $0x98] sm:$0xff]
    %v1424 = vld [vmem:[#allocation2 + $0xa0] sm:$0xff]
    %1425 = vmatprep.subr.mxu0 %v427
    %1426 = vmatpush1.msra.mxu0 %v426
    %1427 = vmatprep.subr.mxu0 %v424
    %1428 = vmatpush1.msra.mxu0 %v423
    %1429 = vmatprep.subr.mxu0 %v421
    %1430 = vmatpush1.msra.mxu0 %v420
    %1431 = vmatprep.subr.mxu0 %v418
    %1432 = vmatpush1.msra.mxu0 %v417
    %1433 = vmatprep.subr.mxu0 %v415
    %1434 = vmatpush1.msra.mxu0 %v414
    %1435 = vmatprep.subr.mxu0 %v412
    %1436 = vmatpush1.msra.mxu0 %v411
    %1437 = vmatprep.subr.mxu0 %v409
    %1438 = vmatpush1.msra.mxu0 %v408
    %1439 = vmatprep.subr.mxu0 %v406
    %1440 = vmatpush1.msra.mxu0 %v405
    %1441 = vmatprep.subr.mxu0 %v403
    %1442 = vmatpush1.msra.mxu0 %v402
    %1443 = vmatprep.subr.mxu0 %v400
    %1444 = vmatpush1.msra.mxu0 %v399
    %1445 = vmatprep.subr.mxu0 %v397
    %1446 = vmatpush1.msra.mxu0 %v396
    %1447 = vmatprep.subr.mxu0 %v394
    %1448 = vmatpush1.msra.mxu0 %v393
    %1449 = vmatprep.subr.mxu0 %v391
    %1450 = vmatpush1.msra.mxu0 %v390
    %1451 = vmatprep.subr.mxu0 %v388
    %1452 = vmatpush1.msra.mxu0 %v387
    %1453 = vmatprep.subr.mxu0 %v385
    %1454 = vmatpush1.msra.mxu0 %v384
    %1455 = vmatprep.subr.mxu0 %v382
    %1456 = vmatpush1.msra.mxu0 %v381
    %1457 = vmatprep.subr.mxu0 0.0
    %1458 = vmatpush2.msra.mxu0 0.0
    %1459 = vmatprep.subr.mxu0 0.0
    %1460 = vmatpush2.msra.mxu0 0.0
    %1461 = vmatprep.subr.mxu0 0.0
    %1462 = vmatpush2.msra.mxu0 0.0
    %1463 = vmatprep.subr.mxu0 0.0
    %1464 = vmatpush2.msra.mxu0 0.0
    %1465 = vmatprep.subr.mxu0 0.0
    %1466 = vmatpush2.msra.mxu0 0.0
    %1467 = vmatprep.subr.mxu0 0.0
    %1468 = vmatpush2.msra.mxu0 0.0
    %1469 = vmatprep.subr.mxu0 0.0
    %1470 = vmatpush2.msra.mxu0 0.0
    %1471 = vmatprep.subr.mxu0 0.0
    %1472 = vmatpush2.msra.mxu0 0.0
    %1473 = vmatprep.subr.mxu0 0.0
    %1474 = vmatpush2.msra.mxu0 0.0
    %1475 = vmatprep.subr.mxu0 0.0
    %1476 = vmatpush2.msra.mxu0 0.0
    %1477 = vmatprep.subr.mxu0 0.0
    %1478 = vmatpush2.msra.mxu0 0.0
    %1479 = vmatprep.subr.mxu0 0.0
    %1480 = vmatpush2.msra.mxu0 0.0
    %1481 = vmatprep.subr.mxu0 0.0
    %1482 = vmatpush2.msra.mxu0 0.0
    %1483 = vmatprep.subr.mxu0 0.0
    %1484 = vmatpush2.msra.mxu0 0.0
    %1485 = vmatprep.subr.mxu0 0.0
    %1486 = vmatpush2.msra.mxu0 0.0
    %1487 = vmatprep.subr.mxu0 0.0
    %1488 = vmatpush2.msra.mxu0 0.0
    %1489 = vmatprep.mubr.f32.mxu0 0.0
    %1490 = vmatmul.mubr.f32.gmra.mxu0 %v1421
    %v1491 = vpop.f32.mrf.mxu0
    %v1492 = vadd.f32 0.0, %v1491
    %v1493 = vpop.f32.mrf.mxu0
    %v1494 = vadd.f32 0.0, %v1493
    %1495 = vdwg.mxu0
    %1496 = vmatprep.subr.mxu0 0.0
    %1497 = vmatpush1.msra.mxu0 %v428
    %1498 = vmatprep.subr.mxu0 0.0
    %1499 = vmatpush1.msra.mxu0 %v425
    %1500 = vmatprep.subr.mxu0 0.0
    %1501 = vmatpush1.msra.mxu0 %v422
    %1502 = vmatprep.subr.mxu0 0.0
    %1503 = vmatpush1.msra.mxu0 %v419
    %1504 = vmatprep.subr.mxu0 0.0
    %1505 = vmatpush1.msra.mxu0 %v416
    %1506 = vmatprep.subr.mxu0 0.0
    %1507 = vmatpush1.msra.mxu0 %v413
    %1508 = vmatprep.subr.mxu0 0.0
    %1509 = vmatpush1.msra.mxu0 %v410
    %1510 = vmatprep.subr.mxu0 0.0
    %1511 = vmatpush1.msra.mxu0 %v407
    %1512 = vmatprep.subr.mxu0 0.0
    %1513 = vmatpush1.msra.mxu0 %v404
    %1514 = vmatprep.subr.mxu0 0.0
    %1515 = vmatpush1.msra.mxu0 %v401
    %1516 = vmatprep.subr.mxu0 0.0
    %1517 = vmatpush1.msra.mxu0 %v398
    %1518 = vmatprep.subr.mxu0 0.0
    %1519 = vmatpush1.msra.mxu0 %v395
    %1520 = vmatprep.subr.mxu0 0.0
    %1521 = vmatpush1.msra.mxu0 %v392
    %1522 = vmatprep.subr.mxu0 0.0
    %1523 = vmatpush1.msra.mxu0 %v389
    %1524 = vmatprep.subr.mxu0 0.0
    %1525 = vmatpush1.msra.mxu0 %v386
    %1526 = vmatprep.subr.mxu0 0.0
    %1527 = vmatpush1.msra.mxu0 %v383
    %1528 = vmatprep.subr.mxu0 0.0
    %1529 = vmatpush2.msra.mxu0 0.0
    %1530 = vmatprep.subr.mxu0 0.0
    %1531 = vmatpush2.msra.mxu0 0.0
    %1532 = vmatprep.subr.mxu0 0.0
    %1533 = vmatpush2.msra.mxu0 0.0
    %1534 = vmatprep.subr.mxu0 0.0
    %1535 = vmatpush2.msra.mxu0 0.0
    %1536 = vmatprep.subr.mxu0 0.0
    %1537 = vmatpush2.msra.mxu0 0.0
    %1538 = vmatprep.subr.mxu0 0.0
    %1539 = vmatpush2.msra.mxu0 0.0
    %1540 = vmatprep.subr.mxu0 0.0
    %1541 = vmatpush2.msra.mxu0 0.0
    %1542 = vmatprep.subr.mxu0 0.0
    %1543 = vmatpush2.msra.mxu0 0.0
    %1544 = vmatprep.subr.mxu0 0.0
    %1545 = vmatpush2.msra.mxu0 0.0
    %1546 = vmatprep.subr.mxu0 0.0
    %1547 = vmatpush2.msra.mxu0 0.0
    %1548 = vmatprep.subr.mxu0 0.0
    %1549 = vmatpush2.msra.mxu0 0.0
    %1550 = vmatprep.subr.mxu0 0.0
    %1551 = vmatpush2.msra.mxu0 0.0
    %1552 = vmatprep.subr.mxu0 0.0
    %1553 = vmatpush2.msra.mxu0 0.0
    %1554 = vmatprep.subr.mxu0 0.0
    %1555 = vmatpush2.msra.mxu0 0.0
    %1556 = vmatprep.subr.mxu0 0.0
    %1557 = vmatpush2.msra.mxu0 0.0
    %1558 = vmatprep.subr.mxu0 0.0
    %1559 = vmatpush2.msra.mxu0 0.0
    %1560 = vmatprep.mubr.f32.mxu0 0.0
    %1561 = vmatmul.mubr.f32.gmra.mxu0 %v1421
    %v1562 = vpop.f32.mrf.mxu0
    %v1563 = vadd.f32 0.0, %v1562
    %v1564 = vpop.f32.mrf.mxu0
    %1565 = vdwg.mxu0
    %v1566 = vadd.f32 %v1422, %v1492
    %v1567 = vxor.u32 %v1566, 2147483648
    %v1568 = vmul.f32 %v1567, 1.442695
    %v1569 = vpow.pop %v1568
    %v1570 = vadd.f32 %v1569, 1.0
    %v1571 = vrcp.pop %v1570
    %v1572 = vmul.f32 1.0, %v1571
    %v1573 = vadd.f32 %v1423, %v1494
    %v1574 = vxor.u32 %v1573, 2147483648
    %v1575 = vmul.f32 %v1574, 1.442695
    %v1576 = vpow.pop %v1575
    %v1577 = vadd.f32 %v1576, 1.0
    %v1578 = vrcp.pop %v1577
    %v1579 = vmul.f32 1.0, %v1578
    %v1580 = vadd.f32 %v1563, %v376
    %v1581 = vmul.f32 %v1572, %v1580
    %v1582 = vadd.f32 %v1424, %v1581
    %v1583 = vtanh.pop %v1582
    %v1584 = vsub.f32 1.0, %v1579
    %v1585 = vmul.f32 %v1584, %v1583
    %v1586 = vmul.f32 %v1579, %v1421
    %v1587 = vadd.f32 %v1585, %v1586
    %v1588 = vld [vmem:[#allocation2 + $0xa8] sm:$0xff]
    %v1589 = vld [vmem:[#allocation2 + $0xb0] sm:$0xff]
    %v1590 = vld [vmem:[#allocation2 + $0xb8] sm:$0xff]
    %1591 = vmatprep.subr.mxu0 %v427
    %1592 = vmatpush1.msra.mxu0 %v426
    %1593 = vmatprep.subr.mxu0 %v424
    %1594 = vmatpush1.msra.mxu0 %v423
    %1595 = vmatprep.subr.mxu0 %v421
    %1596 = vmatpush1.msra.mxu0 %v420
    %1597 = vmatprep.subr.mxu0 %v418
    %1598 = vmatpush1.msra.mxu0 %v417
    %1599 = vmatprep.subr.mxu0 %v415
    %1600 = vmatpush1.msra.mxu0 %v414
    %1601 = vmatprep.subr.mxu0 %v412
    %1602 = vmatpush1.msra.mxu0 %v411
    %1603 = vmatprep.subr.mxu0 %v409
    %1604 = vmatpush1.msra.mxu0 %v408
    %1605 = vmatprep.subr.mxu0 %v406
    %1606 = vmatpush1.msra.mxu0 %v405
    %1607 = vmatprep.subr.mxu0 %v403
    %1608 = vmatpush1.msra.mxu0 %v402
    %1609 = vmatprep.subr.mxu0 %v400
    %1610 = vmatpush1.msra.mxu0 %v399
    %1611 = vmatprep.subr.mxu0 %v397
    %1612 = vmatpush1.msra.mxu0 %v396
    %1613 = vmatprep.subr.mxu0 %v394
    %1614 = vmatpush1.msra.mxu0 %v393
    %1615 = vmatprep.subr.mxu0 %v391
    %1616 = vmatpush1.msra.mxu0 %v390
    %1617 = vmatprep.subr.mxu0 %v388
    %1618 = vmatpush1.msra.mxu0 %v387
    %1619 = vmatprep.subr.mxu0 %v385
    %1620 = vmatpush1.msra.mxu0 %v384
    %1621 = vmatprep.subr.mxu0 %v382
    %1622 = vmatpush1.msra.mxu0 %v381
    %1623 = vmatprep.subr.mxu0 0.0
    %1624 = vmatpush2.msra.mxu0 0.0
    %1625 = vmatprep.subr.mxu0 0.0
    %1626 = vmatpush2.msra.mxu0 0.0
    %1627 = vmatprep.subr.mxu0 0.0
    %1628 = vmatpush2.msra.mxu0 0.0
    %1629 = vmatprep.subr.mxu0 0.0
    %1630 = vmatpush2.msra.mxu0 0.0
    %1631 = vmatprep.subr.mxu0 0.0
    %1632 = vmatpush2.msra.mxu0 0.0
    %1633 = vmatprep.subr.mxu0 0.0
    %1634 = vmatpush2.msra.mxu0 0.0
    %1635 = vmatprep.subr.mxu0 0.0
    %1636 = vmatpush2.msra.mxu0 0.0
    %1637 = vmatprep.subr.mxu0 0.0
    %1638 = vmatpush2.msra.mxu0 0.0
    %1639 = vmatprep.subr.mxu0 0.0
    %1640 = vmatpush2.msra.mxu0 0.0
    %1641 = vmatprep.subr.mxu0 0.0
    %1642 = vmatpush2.msra.mxu0 0.0
    %1643 = vmatprep.subr.mxu0 0.0
    %1644 = vmatpush2.msra.mxu0 0.0
    %1645 = vmatprep.subr.mxu0 0.0
    %1646 = vmatpush2.msra.mxu0 0.0
    %1647 = vmatprep.subr.mxu0 0.0
    %1648 = vmatpush2.msra.mxu0 0.0
    %1649 = vmatprep.subr.mxu0 0.0
    %1650 = vmatpush2.msra.mxu0 0.0
    %1651 = vmatprep.subr.mxu0 0.0
    %1652 = vmatpush2.msra.mxu0 0.0
    %1653 = vmatprep.subr.mxu0 0.0
    %1654 = vmatpush2.msra.mxu0 0.0
    %1655 = vmatprep.mubr.f32.mxu0 0.0
    %1656 = vmatmul.mubr.f32.gmra.mxu0 %v1587
    %v1657 = vpop.f32.mrf.mxu0
    %v1658 = vadd.f32 0.0, %v1657
    %v1659 = vpop.f32.mrf.mxu0
    %v1660 = vadd.f32 0.0, %v1659
    %1661 = vdwg.mxu0
    %1662 = vmatprep.subr.mxu0 0.0
    %1663 = vmatpush1.msra.mxu0 %v428
    %1664 = vmatprep.subr.mxu0 0.0
    %1665 = vmatpush1.msra.mxu0 %v425
    %1666 = vmatprep.subr.mxu0 0.0
    %1667 = vmatpush1.msra.mxu0 %v422
    %1668 = vmatprep.subr.mxu0 0.0
    %1669 = vmatpush1.msra.mxu0 %v419
    %1670 = vmatprep.subr.mxu0 0.0
    %1671 = vmatpush1.msra.mxu0 %v416
    %1672 = vmatprep.subr.mxu0 0.0
    %1673 = vmatpush1.msra.mxu0 %v413
    %1674 = vmatprep.subr.mxu0 0.0
    %1675 = vmatpush1.msra.mxu0 %v410
    %1676 = vmatprep.subr.mxu0 0.0
    %1677 = vmatpush1.msra.mxu0 %v407
    %1678 = vmatprep.subr.mxu0 0.0
    %1679 = vmatpush1.msra.mxu0 %v404
    %1680 = vmatprep.subr.mxu0 0.0
    %1681 = vmatpush1.msra.mxu0 %v401
    %1682 = vmatprep.subr.mxu0 0.0
    %1683 = vmatpush1.msra.mxu0 %v398
    %1684 = vmatprep.subr.mxu0 0.0
    %1685 = vmatpush1.msra.mxu0 %v395
    %1686 = vmatprep.subr.mxu0 0.0
    %1687 = vmatpush1.msra.mxu0 %v392
    %1688 = vmatprep.subr.mxu0 0.0
    %1689 = vmatpush1.msra.mxu0 %v389
    %1690 = vmatprep.subr.mxu0 0.0
    %1691 = vmatpush1.msra.mxu0 %v386
    %1692 = vmatprep.subr.mxu0 0.0
    %1693 = vmatpush1.msra.mxu0 %v383
    %1694 = vmatprep.subr.mxu0 0.0
    %1695 = vmatpush2.msra.mxu0 0.0
    %1696 = vmatprep.subr.mxu0 0.0
    %1697 = vmatpush2.msra.mxu0 0.0
    %1698 = vmatprep.subr.mxu0 0.0
    %1699 = vmatpush2.msra.mxu0 0.0
    %1700 = vmatprep.subr.mxu0 0.0
    %1701 = vmatpush2.msra.mxu0 0.0
    %1702 = vmatprep.subr.mxu0 0.0
    %1703 = vmatpush2.msra.mxu0 0.0
    %1704 = vmatprep.subr.mxu0 0.0
    %1705 = vmatpush2.msra.mxu0 0.0
    %1706 = vmatprep.subr.mxu0 0.0
    %1707 = vmatpush2.msra.mxu0 0.0
    %1708 = vmatprep.subr.mxu0 0.0
    %1709 = vmatpush2.msra.mxu0 0.0
    %1710 = vmatprep.subr.mxu0 0.0
    %1711 = vmatpush2.msra.mxu0 0.0
    %1712 = vmatprep.subr.mxu0 0.0
    %1713 = vmatpush2.msra.mxu0 0.0
    %1714 = vmatprep.subr.mxu0 0.0
    %1715 = vmatpush2.msra.mxu0 0.0
    %1716 = vmatprep.subr.mxu0 0.0
    %1717 = vmatpush2.msra.mxu0 0.0
    %1718 = vmatprep.subr.mxu0 0.0
    %1719 = vmatpush2.msra.mxu0 0.0
    %1720 = vmatprep.subr.mxu0 0.0
    %1721 = vmatpush2.msra.mxu0 0.0
    %1722 = vmatprep.subr.mxu0 0.0
    %1723 = vmatpush2.msra.mxu0 0.0
    %1724 = vmatprep.subr.mxu0 0.0
    %1725 = vmatpush2.msra.mxu0 0.0
    %1726 = vmatprep.mubr.f32.mxu0 0.0
    %1727 = vmatmul.mubr.f32.gmra.mxu0 %v1587
    %v1728 = vpop.f32.mrf.mxu0
    %v1729 = vadd.f32 0.0, %v1728
    %v1730 = vpop.f32.mrf.mxu0
    %1731 = vdwg.mxu0
    %v1732 = vadd.f32 %v1588, %v1658
    %v1733 = vxor.u32 %v1732, 2147483648
    %v1734 = vmul.f32 %v1733, 1.442695
    %v1735 = vpow.pop %v1734
    %v1736 = vadd.f32 %v1735, 1.0
    %v1737 = vrcp.pop %v1736
    %v1738 = vmul.f32 1.0, %v1737
    %v1739 = vadd.f32 %v1589, %v1660
    %v1740 = vxor.u32 %v1739, 2147483648
    %v1741 = vmul.f32 %v1740, 1.442695
    %v1742 = vpow.pop %v1741
    %v1743 = vadd.f32 %v1742, 1.0
    %v1744 = vrcp.pop %v1743
    %v1745 = vmul.f32 1.0, %v1744
    %v1746 = vadd.f32 %v1729, %v376
    %v1747 = vmul.f32 %v1738, %v1746
    %v1748 = vadd.f32 %v1590, %v1747
    %v1749 = vtanh.pop %v1748
    %v1750 = vsub.f32 1.0, %v1745
    %v1751 = vmul.f32 %v1750, %v1749
    %v1752 = vmul.f32 %v1745, %v1587
    %v1753 = vadd.f32 %v1751, %v1752
    %v1754 = vld [vmem:[#allocation5] sm:$0xff]
    %v1755 = vld [vmem:[#allocation5 + $0x8] sm:$0xff]
    %v1756 = vld [vmem:[#allocation5 + $0x10] sm:$0xff]
    %v1757 = vld [vmem:[#allocation5 + $0x18] sm:$0xff]
    %v1758 = vld [vmem:[#allocation5 + $0x20] sm:$0xff]
    %v1759 = vld [vmem:[#allocation5 + $0x28] sm:$0xff]
    %v1760 = vld [vmem:[#allocation5 + $0x30] sm:$0xff]
    %v1761 = vld [vmem:[#allocation5 + $0x38] sm:$0xff]
    %v1762 = vld [vmem:[#allocation5 + $0x40] sm:$0xff]
    %v1763 = vld [vmem:[#allocation5 + $0x48] sm:$0xff]
    %v1764 = vld [vmem:[#allocation5 + $0x50] sm:$0xff]
    %v1765 = vld [vmem:[#allocation5 + $0x58] sm:$0xff]
    %v1766 = vld [vmem:[#allocation5 + $0x60] sm:$0xff]
    %v1767 = vld [vmem:[#allocation5 + $0x68] sm:$0xff]
    %v1768 = vld [vmem:[#allocation5 + $0x70] sm:$0xff]
    %v1769 = vld [vmem:[#allocation5 + $0x78] sm:$0xff]
    %v1770 = vld [vmem:[%s6] sm:$0x1]
    %v1772 = vlaneseq
    %v1773 = vshrl.u32 %v1772, 7
    %v1774 = vsub.s32 0, %v1773
    %v1775 = vrot.slane %v1770, %v1774
    %1777 = vmatprep.subr.mxu0 0.0
    %1778 = vmatpush1.msra.mxu0 %v1769
    %1779 = vmatprep.subr.mxu0 0.0
    %1780 = vmatpush1.msra.mxu0 %v1768
    %1781 = vmatprep.subr.mxu0 0.0
    %1782 = vmatpush1.msra.mxu0 %v1767
    %1783 = vmatprep.subr.mxu0 0.0
    %1784 = vmatpush1.msra.mxu0 %v1766
    %1785 = vmatprep.subr.mxu0 0.0
    %1786 = vmatpush1.msra.mxu0 %v1765
    %1787 = vmatprep.subr.mxu0 0.0
    %1788 = vmatpush1.msra.mxu0 %v1764
    %1789 = vmatprep.subr.mxu0 0.0
    %1790 = vmatpush1.msra.mxu0 %v1763
    %1791 = vmatprep.subr.mxu0 0.0
    %1792 = vmatpush1.msra.mxu0 %v1762
    %1793 = vmatprep.subr.mxu0 0.0
    %1794 = vmatpush1.msra.mxu0 %v1761
    %1795 = vmatprep.subr.mxu0 0.0
    %1796 = vmatpush1.msra.mxu0 %v1760
    %1797 = vmatprep.subr.mxu0 0.0
    %1798 = vmatpush1.msra.mxu0 %v1759
    %1799 = vmatprep.subr.mxu0 0.0
    %1800 = vmatpush1.msra.mxu0 %v1758
    %1801 = vmatprep.subr.mxu0 0.0
    %1802 = vmatpush1.msra.mxu0 %v1757
    %1803 = vmatprep.subr.mxu0 0.0
    %1804 = vmatpush1.msra.mxu0 %v1756
    %1805 = vmatprep.subr.mxu0 0.0
    %1806 = vmatpush1.msra.mxu0 %v1755
    %1807 = vmatprep.subr.mxu0 0.0
    %1808 = vmatpush1.msra.mxu0 %v1754
    %1809 = vmatprep.subr.mxu0 0.0
    %1810 = vmatpush2.msra.mxu0 0.0
    %1811 = vmatprep.subr.mxu0 0.0
    %1812 = vmatpush2.msra.mxu0 0.0
    %1813 = vmatprep.subr.mxu0 0.0
    %1814 = vmatpush2.msra.mxu0 0.0
    %1815 = vmatprep.subr.mxu0 0.0
    %1816 = vmatpush2.msra.mxu0 0.0
    %1817 = vmatprep.subr.mxu0 0.0
    %1818 = vmatpush2.msra.mxu0 0.0
    %1819 = vmatprep.subr.mxu0 0.0
    %1820 = vmatpush2.msra.mxu0 0.0
    %1821 = vmatprep.subr.mxu0 0.0
    %1822 = vmatpush2.msra.mxu0 0.0
    %1823 = vmatprep.subr.mxu0 0.0
    %1824 = vmatpush2.msra.mxu0 0.0
    %1825 = vmatprep.subr.mxu0 0.0
    %1826 = vmatpush2.msra.mxu0 0.0
    %1827 = vmatprep.subr.mxu0 0.0
    %1828 = vmatpush2.msra.mxu0 0.0
    %1829 = vmatprep.subr.mxu0 0.0
    %1830 = vmatpush2.msra.mxu0 0.0
    %1831 = vmatprep.subr.mxu0 0.0
    %1832 = vmatpush2.msra.mxu0 0.0
    %1833 = vmatprep.subr.mxu0 0.0
    %1834 = vmatpush2.msra.mxu0 0.0
    %1835 = vmatprep.subr.mxu0 0.0
    %1836 = vmatpush2.msra.mxu0 0.0
    %1837 = vmatprep.subr.mxu0 0.0
    %1838 = vmatpush2.msra.mxu0 0.0
    %1839 = vmatprep.subr.mxu0 0.0
    %1840 = vmatpush2.msra.mxu0 0.0
    %1841 = vmatprep.mubr.f32.mxu0 0.0
    %1842 = vmatmul.mubr.f32.gmra.mxu0 %v1753
    %v1843 = vpop.f32.mrf.mxu0
    %v1844 = vadd.f32 %v1775, %v1843
    %v1845 = vpop.f32.mrf.mxu0
    %1846 = vdwg.mxu0
    %v1847 = vmax.f32 %v1844, 0.0
    %v1848 = vld [vmem:[#allocation7] sm:$0xff]
    %v1849 = vld [vmem:[#allocation7 + $0x8] sm:$0xff]
    %v1850 = vld [vmem:[#allocation7 + $0x10] sm:$0xff]
    %v1851 = vld [vmem:[#allocation7 + $0x18] sm:$0xff]
    %v1852 = vld [vmem:[#allocation7 + $0x20] sm:$0xff]
    %v1853 = vld [vmem:[#allocation7 + $0x28] sm:$0xff]
    %v1854 = vld [vmem:[#allocation7 + $0x30] sm:$0xff]
    %v1855 = vld [vmem:[#allocation7 + $0x38] sm:$0xff]
    %v1856 = vld [vmem:[#allocation7 + $0x40] sm:$0xff]
    %v1857 = vld [vmem:[#allocation7 + $0x48] sm:$0xff]
    %v1858 = vld [vmem:[#allocation7 + $0x50] sm:$0xff]
    %v1859 = vld [vmem:[#allocation7 + $0x58] sm:$0xff]
    %v1860 = vld [vmem:[#allocation7 + $0x60] sm:$0xff]
    %v1861 = vld [vmem:[#allocation7 + $0x68] sm:$0xff]
    %v1862 = vld [vmem:[#allocation7 + $0x70] sm:$0xff]
    %v1863 = vld [vmem:[#allocation7 + $0x78] sm:$0xff]
    %v1864 = vld [vmem:[%s8] sm:$0x1]
    %v1866 = vlaneseq
    %v1867 = vshrl.u32 %v1866, 7
    %v1868 = vsub.s32 0, %v1867
    %v1869 = vrot.slane %v1864, %v1868
    %1871 = vmatprep.subr.mxu0 0.0
    %1872 = vmatpush1.msra.mxu0 %v1863
    %1873 = vmatprep.subr.mxu0 0.0
    %1874 = vmatpush1.msra.mxu0 %v1862
    %1875 = vmatprep.subr.mxu0 0.0
    %1876 = vmatpush1.msra.mxu0 %v1861
    %1877 = vmatprep.subr.mxu0 0.0
    %1878 = vmatpush1.msra.mxu0 %v1860
    %1879 = vmatprep.subr.mxu0 0.0
    %1880 = vmatpush1.msra.mxu0 %v1859
    %1881 = vmatprep.subr.mxu0 0.0
    %1882 = vmatpush1.msra.mxu0 %v1858
    %1883 = vmatprep.subr.mxu0 0.0
    %1884 = vmatpush1.msra.mxu0 %v1857
    %1885 = vmatprep.subr.mxu0 0.0
    %1886 = vmatpush1.msra.mxu0 %v1856
    %1887 = vmatprep.subr.mxu0 0.0
    %1888 = vmatpush1.msra.mxu0 %v1855
    %1889 = vmatprep.subr.mxu0 0.0
    %1890 = vmatpush1.msra.mxu0 %v1854
    %1891 = vmatprep.subr.mxu0 0.0
    %1892 = vmatpush1.msra.mxu0 %v1853
    %1893 = vmatprep.subr.mxu0 0.0
    %1894 = vmatpush1.msra.mxu0 %v1852
    %1895 = vmatprep.subr.mxu0 0.0
    %1896 = vmatpush1.msra.mxu0 %v1851
    %1897 = vmatprep.subr.mxu0 0.0
    %1898 = vmatpush1.msra.mxu0 %v1850
    %1899 = vmatprep.subr.mxu0 0.0
    %1900 = vmatpush1.msra.mxu0 %v1849
    %1901 = vmatprep.subr.mxu0 0.0
    %1902 = vmatpush1.msra.mxu0 %v1848
    %1903 = vmatprep.subr.mxu0 0.0
    %1904 = vmatpush2.msra.mxu0 0.0
    %1905 = vmatprep.subr.mxu0 0.0
    %1906 = vmatpush2.msra.mxu0 0.0
    %1907 = vmatprep.subr.mxu0 0.0
    %1908 = vmatpush2.msra.mxu0 0.0
    %1909 = vmatprep.subr.mxu0 0.0
    %1910 = vmatpush2.msra.mxu0 0.0
    %1911 = vmatprep.subr.mxu0 0.0
    %1912 = vmatpush2.msra.mxu0 0.0
    %1913 = vmatprep.subr.mxu0 0.0
    %1914 = vmatpush2.msra.mxu0 0.0
    %1915 = vmatprep.subr.mxu0 0.0
    %1916 = vmatpush2.msra.mxu0 0.0
    %1917 = vmatprep.subr.mxu0 0.0
    %1918 = vmatpush2.msra.mxu0 0.0
    %1919 = vmatprep.subr.mxu0 0.0
    %1920 = vmatpush2.msra.mxu0 0.0
    %1921 = vmatprep.subr.mxu0 0.0
    %1922 = vmatpush2.msra.mxu0 0.0
    %1923 = vmatprep.subr.mxu0 0.0
    %1924 = vmatpush2.msra.mxu0 0.0
    %1925 = vmatprep.subr.mxu0 0.0
    %1926 = vmatpush2.msra.mxu0 0.0
    %1927 = vmatprep.subr.mxu0 0.0
    %1928 = vmatpush2.msra.mxu0 0.0
    %1929 = vmatprep.subr.mxu0 0.0
    %1930 = vmatpush2.msra.mxu0 0.0
    %1931 = vmatprep.subr.mxu0 0.0
    %1932 = vmatpush2.msra.mxu0 0.0
    %1933 = vmatprep.subr.mxu0 0.0
    %1934 = vmatpush2.msra.mxu0 0.0
    %1935 = vmatprep.mubr.f32.mxu0 0.0
    %1936 = vmatmul.mubr.f32.gmra.mxu0 %v1847
    %v1937 = vpop.f32.mrf.mxu0
    %v1938 = vadd.f32 %v1869, %v1937
    %v1939 = vpop.f32.mrf.mxu0
    %1940 = vdwg.mxu0
    %1941 = vst [vmem:[%s9] sm:$0xff] %v1938
    // Predicated region
    $region50: #{dqn_forward_pallas.1} parent=1 // pred_check
      _
    $region51: #{dqn_forward_pallas.1} parent=1 // pred_check_branch
      %1943 = sbr.rel (0) target = $region53
    $region52: #{dqn_forward_pallas.1} parent=1 // pred_region
      _
    $region53: #{dqn_forward_pallas.1} parent=1 // pred_fallthru
      _
    // Predicated region
    $region54: #{dqn_forward_pallas.1} parent=1 // pred_check
      _
    $region55: #{dqn_forward_pallas.1} parent=1 // pred_check_branch
      %1945 = sbr.rel (0) target = $region57
    $region56: #{dqn_forward_pallas.1} parent=1 // pred_region
      _
    $region57: #{dqn_forward_pallas.1} parent=1 // pred_fallthru
      _
    %1946 = vsyncpa [#allocation4], 1
    %1947 = vsyncpa [#allocation6], 1

</llo_original>
